<compile_context>
chip_gen: v5e
topology: v5e:2x2
jax: 0.10.0
libtpu: 0.0.40
codegen_flags: <defaults>
</compile_context>

<pallas_src>
import functools

import numpy as np
import jax
import jax.numpy as jnp
from jax import lax
from jax.experimental import pallas as pl
from jax.experimental.pallas import tpu as pltpu


CHANNEL_SIZES = (16, 32, 64)
NUM_CLASSES = 10
PADDED_CLASSES = 128          # lane-dense classifier output width


def _round_up(x, m):
    return ((x + m - 1) // m) * m


# ----------------------------- host-side weight prep -------------------------

def _toeplitz_conv_weight(w_hwio, W):
    """(3,3,C,O) conv weight -> (3, (W+2)*C, W*O) block-Toeplitz matrices.

    Input-column layout : padded width position wp with channels c; interior
        wp=1..W maps to column block wp-1 (interior starts at lane 0), the two
        zero-pad positions map to the last two blocks.
    Output-column layout: (w % 2, w // 2, o)  ->  the 2x2 W-pool is simply the
        max of the two column halves, each exactly (W//2)*O lanes wide.
    """
    _, _, C, O = w_hwio.shape
    Wp, Wo = W + 2, W // 2
    wnp = np.asarray(w_hwio, dtype=np.float32)
    t = np.zeros((3, Wp * C, W * O), np.float32)
    for ky in range(3):
        for kx in range(3):
            for w in range(W):
                icol = ((w + kx - 1) % Wp) * C
                ocol = (w % 2) * (Wo * O) + (w // 2) * O
                t[ky, icol:icol + C, ocol:ocol + O] = wnp[ky, kx]
    return t


def init_params(key, in_channels, height, width,
                channel_sizes=CHANNEL_SIZES, num_classes=NUM_CLASSES):
    """PyTorch-equivalent parameters (HWIO conv weights, (F, 10) fc weight)."""
    params = {"conv": []}
    cin, h, w = in_channels, height, width
    for cout in channel_sizes:
        key, k1, k2 = jax.random.split(key, 3)
        wk = jax.random.normal(k1, (3, 3, cin, cout), jnp.float32) / np.sqrt(9 * cin)
        bk = jax.random.normal(k2, (cout,), jnp.float32) * 0.01
        params["conv"].append((wk, bk))
        cin, h, w = cout, h // 2, w // 2
    key, k1, k2 = jax.random.split(key, 3)
    f = cin * h * w
    params["fc_w"] = jax.random.normal(k1, (f, num_classes), jnp.float32) / np.sqrt(f)
    params["fc_b"] = jax.random.normal(k2, (num_classes,), jnp.float32) * 0.01
    return params


def prepare_params(params, height, width):
    """One-time host-side reshaping / casting of PyTorch-style params."""
    prep = {"t": [], "b": []}
    h, w = height, width
    for (wk, bk) in params["conv"]:
        prep["t"].append(jnp.asarray(_toeplitz_conv_weight(wk, w), jnp.bfloat16))
        prep["b"].append(jnp.tile(bk, w).reshape(1, -1).astype(jnp.float32))
        h, w = h // 2, w // 2
    c_last = params["conv"][-1][0].shape[-1]
    # fc rows are in PyTorch NCHW-flatten order (c, h, w); pre-permute to the
    # kernel's (h, (w, c)) feature layout and zero-pad outputs to 128 lanes.
    w4 = np.asarray(params["fc_w"], np.float32).reshape(c_last, h, w, NUM_CLASSES)
    wfc = np.transpose(w4, (1, 2, 0, 3)).reshape(h, w * c_last, NUM_CLASSES)
    wfc_pad = np.zeros((h, w * c_last, PADDED_CLASSES), np.float32)
    wfc_pad[..., :NUM_CLASSES] = wfc
    bfc_pad = np.zeros((1, PADDED_CLASSES), np.float32)
    bfc_pad[0, :NUM_CLASSES] = np.asarray(params["fc_b"], np.float32)
    prep["wfc"] = jnp.asarray(wfc_pad, jnp.bfloat16)
    prep["bfc"] = jnp.asarray(bfc_pad, jnp.float32)
    return prep


# --------------------------------- kernel ------------------------------------

def _zero_pads(ap, *, nb, h, w, c, P):
    """Zero only the rows / columns of the padded scratch that act as conv padding."""
    cols = ap.shape[1]
    # 8-row header (includes the top pad row of image 0) -- aligned full store.
    ap[0:8, :] = jnp.zeros((8, cols), ap.dtype)
    # spare band of each image: bottom pad of image n (+ top pad of image n+1).
    for n in range(nb):
        ap[8 + n * P + h:8 + (n + 1) * P, :] = jnp.zeros((P - h, cols), ap.dtype)
    # width zero-pad lanes (last 2*c columns of the block-Toeplitz input layout).
    ap[:, w * c:(w + 2) * c] = jnp.zeros((ap.shape[0], 2 * c), ap.dtype)


def _conv_relu_wpool(ap, t_ref, b_ref, yscr, *, nb, h, w, cout, P):
    """3x3 conv (3 unit-stride block-Toeplitz bf16 matmuls, f32 accum) + bias +
    ReLU + 2x2 W-pool.  yscr row m = n*P + r (r = 0..h-1) holds image n's conv
    row r, W-pooled to (w//2)*cout lanes."""
    M = (nb - 1) * P + h
    half = (w // 2) * cout
    acc = jnp.dot(ap[7:7 + M, :].astype(jnp.bfloat16), t_ref[0],
                  preferred_element_type=jnp.float32) + b_ref[...]
    acc = acc + jnp.dot(ap[8:8 + M, :].astype(jnp.bfloat16), t_ref[1],
                        preferred_element_type=jnp.float32)
    acc = acc + jnp.dot(ap[9:9 + M, :].astype(jnp.bfloat16), t_ref[2],
                        preferred_element_type=jnp.float32)
    y = jnp.maximum(acc, 0.0)
    yscr[0:M, 0:half] = jnp.maximum(y[:, :half], y[:, half:])


def _hpool_stage(yscr, ap_next, *, nb, h, w, cout, P, P_next):
    """2x2 H-pool of the W-pooled conv result fused with staging into the next
    padded scratch (interior starts on an 8-aligned row)."""
    half = (w // 2) * cout
    hn = h // 2
    for n in range(nb):
        even = yscr[pl.ds(n * P, hn, stride=2), 0:half]
        odd = yscr[pl.ds(n * P + 1, hn, stride=2), 0:half]
        ap_next[8 + n * P_next:8 + n * P_next + hn, 0:half] = \
            jnp.maximum(even, odd).astype(ap_next.dtype)


def _fused_forward_kernel(x_ref, t1_ref, b1_ref, t2_ref, b2_ref, t3_ref, b3_ref,
                          wfc_ref, bfc_ref, o_ref, ap1, ap2, ap3, yscr,
                          *, nb, h, w, cin):
    c1, c2, c3 = CHANNEL_SIZES
    h2, w2, h3, w3 = h // 2, w // 2, h // 4, w // 4
    ho = h3 // 2
    P1 = _round_up(h + 2, 8)
    P2 = _round_up(h2 + 2, 8)
    P3 = _round_up(h3 + 2, 8)

    # ---- conv block 1: stage interiors at 8-aligned rows, conv + ReLU + W-pool
    _zero_pads(ap1, nb=nb, h=h, w=w, c=cin, P=P1)
    for n in range(nb):
        ap1[8 + n * P1:8 + n * P1 + h, 0:w * cin] = x_ref[n * h:(n + 1) * h, :]
    _conv_relu_wpool(ap1, t1_ref, b1_ref, yscr, nb=nb, h=h, w=w, cout=c1, P=P1)

    # ---- conv block 2
    _zero_pads(ap2, nb=nb, h=h2, w=w2, c=c1, P=P2)
    _hpool_stage(yscr, ap2, nb=nb, h=h, w=w, cout=c1, P=P1, P_next=P2)
    _conv_relu_wpool(ap2, t2_ref, b2_ref, yscr, nb=nb, h=h2, w=w2, cout=c2, P=P2)

    # ---- conv block 3
    _zero_pads(ap3, nb=nb, h=h3, w=w3, c=c2, P=P3)
    _hpool_stage(yscr, ap3, nb=nb, h=h2, w=w2, cout=c2, P=P2, P_next=P3)
    _conv_relu_wpool(ap3, t3_ref, b3_ref, yscr, nb=nb, h=h3, w=w3, cout=c3, P=P3)

    # ---- H-pool of block 3 fused with the 128-lane-padded classifier
    half3 = (w3 // 2) * c3
    logits = bfc_ref[...]                                     # (1, 128) f32
    for i in range(ho):
        if nb == 1:
            even = yscr[pl.ds(2 * i, 1), 0:half3]
            odd = yscr[pl.ds(2 * i + 1, 1), 0:half3]
        else:
            even = yscr[pl.ds(2 * i, nb, stride=P3), 0:half3]
            odd = yscr[pl.ds(2 * i + 1, nb, stride=P3), 0:half3]
        f_i = jnp.maximum(even, odd).astype(jnp.bfloat16)     # (nb, 128)
        logits = logits + jnp.dot(f_i, wfc_ref[i],
                                  preferred_element_type=jnp.float32)

    rb = o_ref.shape[0]
    if rb > nb:                                               # zero the pad rows
        o_ref[nb:rb, :] = jnp.zeros((rb - nb, o_ref.shape[1]), o_ref.dtype)
    o_ref[0:nb, :] = logits.astype(o_ref.dtype)


# --------------------------------- wrapper ------------------------------------

def custom_model_forward(x_nchw, prep, *, batch_block=1):
    """Fused forward pass.  `batch_block` images per grid step ("parallel" axis:
    shards across v7x TensorCores; increase it to enlarge the MXU M dim on v6e)."""
    n, cin, h, w = x_nchw.shape
    assert h % 8 == 0 and w % 8 == 0, "three 2x2 pools require H, W divisible by 8"
    nb = min(batch_block, n)
    assert n % nb == 0, "batch must be divisible by the per-step batch tile"
    num_tiles = n // nb
    rb = _round_up(nb, 8)                         # output rows per tile (block-legal)
    c1, c2, c3 = CHANNEL_SIZES
    h2, w2, h3, w3 = h // 2, w // 2, h // 4, w // 4
    P1, P2, P3 = (_round_up(h + 2, 8), _round_up(h2 + 2, 8), _round_up(h3 + 2, 8))
    m1 = (nb - 1) * P1 + h
    yw = max((w // 2) * c1, (w2 // 2) * c2, (w3 // 2) * c3)

    # NCHW -> NHWC -> (N*H, W*Cin): rows are image rows, columns are (w, c).
    x2 = jnp.transpose(x_nchw, (0, 2, 3, 1)).reshape(n * h, w * cin)

    t1, t2, t3 = prep["t"]
    b1, b2, b3 = prep["b"]
    wfc, bfc = prep["wfc"], prep["bfc"]

    def const_spec(a):                            # weights: fetched once, never re-DMA'd
        nd = a.ndim
        return pl.BlockSpec(a.shape, lambda i: (0,) * nd)

    kern = functools.partial(_fused_forward_kernel, nb=nb, h=h, w=w, cin=cin)
    out = pl.pallas_call(
        kern,
        out_shape=jax.ShapeDtypeStruct((num_tiles * rb, PADDED_CLASSES), jnp.float32),
        grid_spec=pltpu.PrefetchScalarGridSpec(
            num_scalar_prefetch=0,
            grid=(num_tiles,),
            in_specs=[pl.BlockSpec((nb * h, w * cin), lambda i: (i, 0)),
                      const_spec(t1), const_spec(b1),
                      const_spec(t2), const_spec(b2),
                      const_spec(t3), const_spec(b3),
                      const_spec(wfc), const_spec(bfc)],
            out_specs=pl.BlockSpec((rb, PADDED_CLASSES), lambda i: (i, 0)),
            scratch_shapes=[
                pltpu.VMEM((8 + nb * P1, (w + 2) * cin), jnp.float32),     # ap1
                pltpu.VMEM((8 + nb * P2, (w2 + 2) * c1), jnp.float32),     # ap2
                pltpu.VMEM((8 + nb * P3, (w3 + 2) * c2), jnp.float32),     # ap3
                pltpu.VMEM((m1, yw), jnp.float32),                         # conv/W-pool result
            ],
        ),
        compiler_params=pltpu.CompilerParams(
            dimension_semantics=("parallel",),
            vmem_limit_bytes=32 * 1024 * 1024),
    )(x2, t1, b1, t2, b2, t3, b3, wfc, bfc)

    logits = out.reshape(num_tiles, rb, PADDED_CLASSES)[:, :nb, :]
    return logits.reshape(n, PADDED_CLASSES)[:, :NUM_CLASSES]


# ------------------------------- reference ------------------------------------

def reference_forward(x_nchw, params):
    """Pure-JAX reference matching the PyTorch forward semantics."""
    x = jnp.transpose(x_nchw, (0, 2, 3, 1))
    for (w, b) in params["conv"]:
        y = lax.conv_general_dilated(
            x, w, (1, 1), "SAME",
            dimension_numbers=("NHWC", "HWIO", "NHWC"),
            precision=lax.Precision.HIGHEST) + b
        y = jnp.maximum(y, 0.0)
        x = lax.reduce_window(y, -jnp.inf, lax.max,
                              (1, 2, 2, 1), (1, 2, 2, 1), "VALID")
    n, ho, wo, c = x.shape
    feat = jnp.transpose(x, (0, 3, 1, 2)).reshape(n, c * ho * wo)
    return feat @ params["fc_w"] + params["fc_b"]


if __name__ == "__main__":
    key = jax.random.PRNGKey(0)
    k_x, k_p = jax.random.split(key)

    # input_size = (4, 16, 16) -> channels [16, 32, 64], spatial 16->8->4->2
    N, Cin, H, W = 2, 4, 16, 16
    x = jax.random.normal(k_x, (N, Cin, H, W), jnp.float32)
    params = init_params(k_p, Cin, H, W)
    prep = prepare_params(params, H, W)

    out = jax.block_until_ready(custom_model_forward(x, prep, batch_block=1))
    ref = jax.block_until_ready(reference_forward(x, params))

    assert out.shape == (N, 10), out.shape
    np.testing.assert_allclose(np.asarray(out), np.asarray(ref), rtol=2e-2, atol=2e-2)
    print("KERNEL_OK")
</pallas_src>

<mosaic_0001>
module attributes {stable_mosaic.version = 11 : i64} {
  func.func @_fused_forward_kernel(%arg0: i32, %arg1: memref<16x64xf32, #tpu.memory_space<vmem>>, %arg2: memref<3x72x256xbf16, #tpu.memory_space<vmem>>, %arg3: memref<1x256xf32, #tpu.memory_space<vmem>>, %arg4: memref<3x160x256xbf16, #tpu.memory_space<vmem>>, %arg5: memref<1x256xf32, #tpu.memory_space<vmem>>, %arg6: memref<3x192x256xbf16, #tpu.memory_space<vmem>>, %arg7: memref<1x256xf32, #tpu.memory_space<vmem>>, %arg8: memref<2x128x128xbf16, #tpu.memory_space<vmem>>, %arg9: memref<1x128xf32, #tpu.memory_space<vmem>>, %arg10: memref<8x128xf32, #tpu.memory_space<vmem>>, %arg11: memref<32x72xf32, #tpu.memory_space<vmem>>, %arg12: memref<24x160xf32, #tpu.memory_space<vmem>>, %arg13: memref<16x192xf32, #tpu.memory_space<vmem>>, %arg14: memref<16x128xf32, #tpu.memory_space<vmem>>) attributes {dimension_semantics = [#tpu.dimension_semantics<parallel>], iteration_bounds = array<i64: 2>, scalar_prefetch = 0 : i64, scratch_operands = 4 : i64, tpu.core_type = #tpu.core_type<tc>, window_params = [{transform_indices = @transform_0, window_bounds = array<i64: 16, 64>}, {pipeline_mode = #tpu.pipeline_mode<synchronous>, transform_indices = @transform_1, window_bounds = array<i64: 3, 72, 256>}, {pipeline_mode = #tpu.pipeline_mode<synchronous>, transform_indices = @transform_2, window_bounds = array<i64: 1, 256>}, {pipeline_mode = #tpu.pipeline_mode<synchronous>, transform_indices = @transform_3, window_bounds = array<i64: 3, 160, 256>}, {pipeline_mode = #tpu.pipeline_mode<synchronous>, transform_indices = @transform_4, window_bounds = array<i64: 1, 256>}, {pipeline_mode = #tpu.pipeline_mode<synchronous>, transform_indices = @transform_5, window_bounds = array<i64: 3, 192, 256>}, {pipeline_mode = #tpu.pipeline_mode<synchronous>, transform_indices = @transform_6, window_bounds = array<i64: 1, 256>}, {pipeline_mode = #tpu.pipeline_mode<synchronous>, transform_indices = @transform_7, window_bounds = array<i64: 2, 128, 128>}, {pipeline_mode = #tpu.pipeline_mode<synchronous>, transform_indices = @transform_8, window_bounds = array<i64: 1, 128>}, {transform_indices = @transform_9, window_bounds = array<i64: 8, 128>}]} {
    %cst = arith.constant 0.000000e+00 : f32
    %0 = vector.broadcast %cst : f32 to vector<8x72xf32>
    %c0 = arith.constant 0 : index
    %c0_0 = arith.constant 0 : index
    %1 = vector.load %arg11[%c0, %c0_0] : memref<32x72xf32, #tpu.memory_space<vmem>>, vector<8x72xf32>
    tpu.vector_store %arg11[%c0, %c0_0], %0 {strides = array<i32>} : memref<32x72xf32, #tpu.memory_space<vmem>>, vector<8x72xf32>,
    %cst_1 = arith.constant 0.000000e+00 : f32
    %2 = vector.broadcast %cst_1 : f32 to vector<8x72xf32>
    %c24 = arith.constant 24 : index
    %c0_2 = arith.constant 0 : index
    %3 = vector.load %arg11[%c24, %c0_2] : memref<32x72xf32, #tpu.memory_space<vmem>>, vector<8x72xf32>
    tpu.vector_store %arg11[%c24, %c0_2], %2 {strides = array<i32>} : memref<32x72xf32, #tpu.memory_space<vmem>>, vector<8x72xf32>,
    %cst_3 = arith.constant 0.000000e+00 : f32
    %4 = vector.broadcast %cst_3 : f32 to vector<32x8xf32>
    %c0_4 = arith.constant 0 : index
    %c64 = arith.constant 64 : index
    %5 = vector.load %arg11[%c0_4, %c64] : memref<32x72xf32, #tpu.memory_space<vmem>>, vector<32x8xf32>
    tpu.vector_store %arg11[%c0_4, %c64], %4 {strides = array<i32>} : memref<32x72xf32, #tpu.memory_space<vmem>>, vector<32x8xf32>,
    %c0_5 = arith.constant 0 : index
    %c0_6 = arith.constant 0 : index
    %6 = vector.load %arg1[%c0_5, %c0_6] : memref<16x64xf32, #tpu.memory_space<vmem>>, vector<16x64xf32>
    %c8 = arith.constant 8 : index
    %c0_7 = arith.constant 0 : index
    %7 = vector.load %arg11[%c8, %c0_7] : memref<32x72xf32, #tpu.memory_space<vmem>>, vector<16x64xf32>
    tpu.vector_store %arg11[%c8, %c0_7], %6 {strides = array<i32>} : memref<32x72xf32, #tpu.memory_space<vmem>>, vector<16x64xf32>,
    %c7 = arith.constant 7 : index
    %c0_8 = arith.constant 0 : index
    %8 = vector.load %arg11[%c7, %c0_8] : memref<32x72xf32, #tpu.memory_space<vmem>>, vector<16x72xf32>
    %9 = arith.truncf %8 : vector<16x72xf32> to vector<16x72xbf16>
    %c0_9 = arith.constant 0 : index
    %c0_10 = arith.constant 0 : index
    %c0_11 = arith.constant 0 : index
    %10 = vector.load %arg2[%c0_9, %c0_10, %c0_11] : memref<3x72x256xbf16, #tpu.memory_space<vmem>>, vector<1x72x256xbf16>
    %11 = vector.shape_cast %10 : vector<1x72x256xbf16> to vector<72x256xbf16>
    %cst_12 = arith.constant dense<0.000000e+00> : vector<16x256xf32>
    %12 = tpu.matmul %9, %11, %cst_12 {dimension_numbers = #tpu.dot_dimension_numbers<[1], [0], [0], [1], [0, 0, 1, 1], [], []>} : vector<16x72xbf16>, vector<72x256xbf16>, vector<16x256xf32> -> vector<16x256xf32>
    %c0_13 = arith.constant 0 : index
    %c0_14 = arith.constant 0 : index
    %13 = vector.load %arg3[%c0_13, %c0_14] : memref<1x256xf32, #tpu.memory_space<vmem>>, vector<1x256xf32>
    %14 = vector.broadcast %13 : vector<1x256xf32> to vector<16x256xf32>
    %15 = arith.addf %12, %14 : vector<16x256xf32>
    %c8_15 = arith.constant 8 : index
    %c0_16 = arith.constant 0 : index
    %16 = vector.load %arg11[%c8_15, %c0_16] : memref<32x72xf32, #tpu.memory_space<vmem>>, vector<16x72xf32>
    %17 = arith.truncf %16 : vector<16x72xf32> to vector<16x72xbf16>
    %c1 = arith.constant 1 : index
    %c0_17 = arith.constant 0 : index
    %c0_18 = arith.constant 0 : index
    %18 = vector.load %arg2[%c1, %c0_17, %c0_18] : memref<3x72x256xbf16, #tpu.memory_space<vmem>>, vector<1x72x256xbf16>
    %19 = vector.shape_cast %18 : vector<1x72x256xbf16> to vector<72x256xbf16>
    %cst_19 = arith.constant dense<0.000000e+00> : vector<16x256xf32>
    %20 = tpu.matmul %17, %19, %cst_19 {dimension_numbers = #tpu.dot_dimension_numbers<[1], [0], [0], [1], [0, 0, 1, 1], [], []>} : vector<16x72xbf16>, vector<72x256xbf16>, vector<16x256xf32> -> vector<16x256xf32>
    %21 = arith.addf %15, %20 : vector<16x256xf32>
    %c9 = arith.constant 9 : index
    %c0_20 = arith.constant 0 : index
    %22 = vector.load %arg11[%c9, %c0_20] : memref<32x72xf32, #tpu.memory_space<vmem>>, vector<16x72xf32>
    %23 = arith.truncf %22 : vector<16x72xf32> to vector<16x72xbf16>
    %c2 = arith.constant 2 : index
    %c0_21 = arith.constant 0 : index
    %c0_22 = arith.constant 0 : index
    %24 = vector.load %arg2[%c2, %c0_21, %c0_22] : memref<3x72x256xbf16, #tpu.memory_space<vmem>>, vector<1x72x256xbf16>
    %25 = vector.shape_cast %24 : vector<1x72x256xbf16> to vector<72x256xbf16>
    %cst_23 = arith.constant dense<0.000000e+00> : vector<16x256xf32>
    %26 = tpu.matmul %23, %25, %cst_23 {dimension_numbers = #tpu.dot_dimension_numbers<[1], [0], [0], [1], [0, 0, 1, 1], [], []>} : vector<16x72xbf16>, vector<72x256xbf16>, vector<16x256xf32> -> vector<16x256xf32>
    %27 = arith.addf %21, %26 : vector<16x256xf32>
    %cst_24 = arith.constant 0.000000e+00 : f32
    %28 = vector.broadcast %cst_24 : f32 to vector<16x256xf32>
    %29 = arith.maximumf %27, %28 : vector<16x256xf32>
    %30 = vector.extract_strided_slice %29 {offsets = [0, 0], sizes = [16, 128], strides = [1, 1]} : vector<16x256xf32> to vector<16x128xf32>
    %31 = vector.extract_strided_slice %29 {offsets = [0, 128], sizes = [16, 128], strides = [1, 1]} : vector<16x256xf32> to vector<16x128xf32>
    %32 = arith.maximumf %30, %31 : vector<16x128xf32>
    %c0_25 = arith.constant 0 : index
    %c0_26 = arith.constant 0 : index
    %33 = vector.load %arg14[%c0_25, %c0_26] : memref<16x128xf32, #tpu.memory_space<vmem>>, vector<16x128xf32>
    tpu.vector_store %arg14[%c0_25, %c0_26], %32 {strides = array<i32>} : memref<16x128xf32, #tpu.memory_space<vmem>>, vector<16x128xf32>,
    %cst_27 = arith.constant 0.000000e+00 : f32
    %34 = vector.broadcast %cst_27 : f32 to vector<8x160xf32>
    %c0_28 = arith.constant 0 : index
    %c0_29 = arith.constant 0 : index
    %35 = vector.load %arg12[%c0_28, %c0_29] : memref<24x160xf32, #tpu.memory_space<vmem>>, vector<8x160xf32>
    tpu.vector_store %arg12[%c0_28, %c0_29], %34 {strides = array<i32>} : memref<24x160xf32, #tpu.memory_space<vmem>>, vector<8x160xf32>,
    %cst_30 = arith.constant 0.000000e+00 : f32
    %36 = vector.broadcast %cst_30 : f32 to vector<8x160xf32>
    %c16 = arith.constant 16 : index
    %c0_31 = arith.constant 0 : index
    %37 = vector.load %arg12[%c16, %c0_31] : memref<24x160xf32, #tpu.memory_space<vmem>>, vector<8x160xf32>
    tpu.vector_store %arg12[%c16, %c0_31], %36 {strides = array<i32>} : memref<24x160xf32, #tpu.memory_space<vmem>>, vector<8x160xf32>,
    %cst_32 = arith.constant 0.000000e+00 : f32
    %38 = vector.broadcast %cst_32 : f32 to vector<24x32xf32>
    %c0_33 = arith.constant 0 : index
    %c128 = arith.constant 128 : index
    %39 = vector.load %arg12[%c0_33, %c128] : memref<24x160xf32, #tpu.memory_space<vmem>>, vector<24x32xf32>
    tpu.vector_store %arg12[%c0_33, %c128], %38 {strides = array<i32>} : memref<24x160xf32, #tpu.memory_space<vmem>>, vector<24x32xf32>,
    %c0_34 = arith.constant 0 : index
    %c0_35 = arith.constant 0 : index
    %40 = tpu.strided_load %arg14[%c0_34, %c0_35] {strides = array<i32: 2, 1>} : memref<16x128xf32, #tpu.memory_space<vmem>>, vector<8x128xf32>
    %c1_36 = arith.constant 1 : index
    %c0_37 = arith.constant 0 : index
    %41 = tpu.strided_load %arg14[%c1_36, %c0_37] {strides = array<i32: 2, 1>} : memref<16x128xf32, #tpu.memory_space<vmem>>, vector<8x128xf32>
    %42 = arith.maximumf %40, %41 : vector<8x128xf32>
    %c8_38 = arith.constant 8 : index
    %c0_39 = arith.constant 0 : index
    %43 = vector.load %arg12[%c8_38, %c0_39] : memref<24x160xf32, #tpu.memory_space<vmem>>, vector<8x128xf32>
    tpu.vector_store %arg12[%c8_38, %c0_39], %42 {strides = array<i32>} : memref<24x160xf32, #tpu.memory_space<vmem>>, vector<8x128xf32>,
    %c7_40 = arith.constant 7 : index
    %c0_41 = arith.constant 0 : index
    %44 = vector.load %arg12[%c7_40, %c0_41] : memref<24x160xf32, #tpu.memory_space<vmem>>, vector<8x160xf32>
    %45 = arith.truncf %44 : vector<8x160xf32> to vector<8x160xbf16>
    %c0_42 = arith.constant 0 : index
    %c0_43 = arith.constant 0 : index
    %c0_44 = arith.constant 0 : index
    %46 = vector.load %arg4[%c0_42, %c0_43, %c0_44] : memref<3x160x256xbf16, #tpu.memory_space<vmem>>, vector<1x160x256xbf16>
    %47 = vector.shape_cast %46 : vector<1x160x256xbf16> to vector<160x256xbf16>
    %cst_45 = arith.constant dense<0.000000e+00> : vector<8x256xf32>
    %48 = tpu.matmul %45, %47, %cst_45 {dimension_numbers = #tpu.dot_dimension_numbers<[1], [0], [0], [1], [0, 0, 1, 1], [], []>} : vector<8x160xbf16>, vector<160x256xbf16>, vector<8x256xf32> -> vector<8x256xf32>
    %c0_46 = arith.constant 0 : index
    %c0_47 = arith.constant 0 : index
    %49 = vector.load %arg5[%c0_46, %c0_47] : memref<1x256xf32, #tpu.memory_space<vmem>>, vector<1x256xf32>
    %50 = vector.broadcast %49 : vector<1x256xf32> to vector<8x256xf32>
    %51 = arith.addf %48, %50 : vector<8x256xf32>
    %c8_48 = arith.constant 8 : index
    %c0_49 = arith.constant 0 : index
    %52 = vector.load %arg12[%c8_48, %c0_49] : memref<24x160xf32, #tpu.memory_space<vmem>>, vector<8x160xf32>
    %53 = arith.truncf %52 : vector<8x160xf32> to vector<8x160xbf16>
    %c1_50 = arith.constant 1 : index
    %c0_51 = arith.constant 0 : index
    %c0_52 = arith.constant 0 : index
    %54 = vector.load %arg4[%c1_50, %c0_51, %c0_52] : memref<3x160x256xbf16, #tpu.memory_space<vmem>>, vector<1x160x256xbf16>
    %55 = vector.shape_cast %54 : vector<1x160x256xbf16> to vector<160x256xbf16>
    %cst_53 = arith.constant dense<0.000000e+00> : vector<8x256xf32>
    %56 = tpu.matmul %53, %55, %cst_53 {dimension_numbers = #tpu.dot_dimension_numbers<[1], [0], [0], [1], [0, 0, 1, 1], [], []>} : vector<8x160xbf16>, vector<160x256xbf16>, vector<8x256xf32> -> vector<8x256xf32>
    %57 = arith.addf %51, %56 : vector<8x256xf32>
    %c9_54 = arith.constant 9 : index
    %c0_55 = arith.constant 0 : index
    %58 = vector.load %arg12[%c9_54, %c0_55] : memref<24x160xf32, #tpu.memory_space<vmem>>, vector<8x160xf32>
    %59 = arith.truncf %58 : vector<8x160xf32> to vector<8x160xbf16>
    %c2_56 = arith.constant 2 : index
    %c0_57 = arith.constant 0 : index
    %c0_58 = arith.constant 0 : index
    %60 = vector.load %arg4[%c2_56, %c0_57, %c0_58] : memref<3x160x256xbf16, #tpu.memory_space<vmem>>, vector<1x160x256xbf16>
    %61 = vector.shape_cast %60 : vector<1x160x256xbf16> to vector<160x256xbf16>
    %cst_59 = arith.constant dense<0.000000e+00> : vector<8x256xf32>
    %62 = tpu.matmul %59, %61, %cst_59 {dimension_numbers = #tpu.dot_dimension_numbers<[1], [0], [0], [1], [0, 0, 1, 1], [], []>} : vector<8x160xbf16>, vector<160x256xbf16>, vector<8x256xf32> -> vector<8x256xf32>
    %63 = arith.addf %57, %62 : vector<8x256xf32>
    %cst_60 = arith.constant 0.000000e+00 : f32
    %64 = vector.broadcast %cst_60 : f32 to vector<8x256xf32>
    %65 = arith.maximumf %63, %64 : vector<8x256xf32>
    %66 = vector.extract_strided_slice %65 {offsets = [0, 0], sizes = [8, 128], strides = [1, 1]} : vector<8x256xf32> to vector<8x128xf32>
    %67 = vector.extract_strided_slice %65 {offsets = [0, 128], sizes = [8, 128], strides = [1, 1]} : vector<8x256xf32> to vector<8x128xf32>
    %68 = arith.maximumf %66, %67 : vector<8x128xf32>
    %c0_61 = arith.constant 0 : index
    %c0_62 = arith.constant 0 : index
    %69 = vector.load %arg14[%c0_61, %c0_62] : memref<16x128xf32, #tpu.memory_space<vmem>>, vector<8x128xf32>
    tpu.vector_store %arg14[%c0_61, %c0_62], %68 {strides = array<i32>} : memref<16x128xf32, #tpu.memory_space<vmem>>, vector<8x128xf32>,
    %cst_63 = arith.constant 0.000000e+00 : f32
    %70 = vector.broadcast %cst_63 : f32 to vector<8x192xf32>
    %c0_64 = arith.constant 0 : index
    %c0_65 = arith.constant 0 : index
    %71 = vector.load %arg13[%c0_64, %c0_65] : memref<16x192xf32, #tpu.memory_space<vmem>>, vector<8x192xf32>
    tpu.vector_store %arg13[%c0_64, %c0_65], %70 {strides = array<i32>} : memref<16x192xf32, #tpu.memory_space<vmem>>, vector<8x192xf32>,
    %cst_66 = arith.constant 0.000000e+00 : f32
    %72 = vector.broadcast %cst_66 : f32 to vector<4x192xf32>
    %c12 = arith.constant 12 : index
    %c0_67 = arith.constant 0 : index
    %73 = vector.load %arg13[%c12, %c0_67] : memref<16x192xf32, #tpu.memory_space<vmem>>, vector<4x192xf32>
    tpu.vector_store %arg13[%c12, %c0_67], %72 {strides = array<i32>} : memref<16x192xf32, #tpu.memory_space<vmem>>, vector<4x192xf32>,
    %cst_68 = arith.constant 0.000000e+00 : f32
    %74 = vector.broadcast %cst_68 : f32 to vector<16x64xf32>
    %c0_69 = arith.constant 0 : index
    %c128_70 = arith.constant 128 : index
    %75 = vector.load %arg13[%c0_69, %c128_70] : memref<16x192xf32, #tpu.memory_space<vmem>>, vector<16x64xf32>
    tpu.vector_store %arg13[%c0_69, %c128_70], %74 {strides = array<i32>} : memref<16x192xf32, #tpu.memory_space<vmem>>, vector<16x64xf32>,
    %c0_71 = arith.constant 0 : index
    %c0_72 = arith.constant 0 : index
    %76 = tpu.strided_load %arg14[%c0_71, %c0_72] {strides = array<i32: 2, 1>} : memref<16x128xf32, #tpu.memory_space<vmem>>, vector<4x128xf32>
    %c1_73 = arith.constant 1 : index
    %c0_74 = arith.constant 0 : index
    %77 = tpu.strided_load %arg14[%c1_73, %c0_74] {strides = array<i32: 2, 1>} : memref<16x128xf32, #tpu.memory_space<vmem>>, vector<4x128xf32>
    %78 = arith.maximumf %76, %77 : vector<4x128xf32>
    %c8_75 = arith.constant 8 : index
    %c0_76 = arith.constant 0 : index
    %79 = vector.load %arg13[%c8_75, %c0_76] : memref<16x192xf32, #tpu.memory_space<vmem>>, vector<4x128xf32>
    tpu.vector_store %arg13[%c8_75, %c0_76], %78 {strides = array<i32>} : memref<16x192xf32, #tpu.memory_space<vmem>>, vector<4x128xf32>,
    %c7_77 = arith.constant 7 : index
    %c0_78 = arith.constant 0 : index
    %80 = vector.load %arg13[%c7_77, %c0_78] : memref<16x192xf32, #tpu.memory_space<vmem>>, vector<4x192xf32>
    %81 = arith.truncf %80 : vector<4x192xf32> to vector<4x192xbf16>
    %c0_79 = arith.constant 0 : index
    %c0_80 = arith.constant 0 : index
    %c0_81 = arith.constant 0 : index
    %82 = vector.load %arg6[%c0_79, %c0_80, %c0_81] : memref<3x192x256xbf16, #tpu.memory_space<vmem>>, vector<1x192x256xbf16>
    %83 = vector.shape_cast %82 : vector<1x192x256xbf16> to vector<192x256xbf16>
    %cst_82 = arith.constant dense<0.000000e+00> : vector<4x256xf32>
    %84 = tpu.matmul %81, %83, %cst_82 {dimension_numbers = #tpu.dot_dimension_numbers<[1], [0], [0], [1], [0, 0, 1, 1], [], []>} : vector<4x192xbf16>, vector<192x256xbf16>, vector<4x256xf32> -> vector<4x256xf32>
    %c0_83 = arith.constant 0 : index
    %c0_84 = arith.constant 0 : index
    %85 = vector.load %arg7[%c0_83, %c0_84] : memref<1x256xf32, #tpu.memory_space<vmem>>, vector<1x256xf32>
    %86 = vector.broadcast %85 : vector<1x256xf32> to vector<4x256xf32>
    %87 = arith.addf %84, %86 : vector<4x256xf32>
    %c8_85 = arith.constant 8 : index
    %c0_86 = arith.constant 0 : index
    %88 = vector.load %arg13[%c8_85, %c0_86] : memref<16x192xf32, #tpu.memory_space<vmem>>, vector<4x192xf32>
    %89 = arith.truncf %88 : vector<4x192xf32> to vector<4x192xbf16>
    %c1_87 = arith.constant 1 : index
    %c0_88 = arith.constant 0 : index
    %c0_89 = arith.constant 0 : index
    %90 = vector.load %arg6[%c1_87, %c0_88, %c0_89] : memref<3x192x256xbf16, #tpu.memory_space<vmem>>, vector<1x192x256xbf16>
    %91 = vector.shape_cast %90 : vector<1x192x256xbf16> to vector<192x256xbf16>
    %cst_90 = arith.constant dense<0.000000e+00> : vector<4x256xf32>
    %92 = tpu.matmul %89, %91, %cst_90 {dimension_numbers = #tpu.dot_dimension_numbers<[1], [0], [0], [1], [0, 0, 1, 1], [], []>} : vector<4x192xbf16>, vector<192x256xbf16>, vector<4x256xf32> -> vector<4x256xf32>
    %93 = arith.addf %87, %92 : vector<4x256xf32>
    %c9_91 = arith.constant 9 : index
    %c0_92 = arith.constant 0 : index
    %94 = vector.load %arg13[%c9_91, %c0_92] : memref<16x192xf32, #tpu.memory_space<vmem>>, vector<4x192xf32>
    %95 = arith.truncf %94 : vector<4x192xf32> to vector<4x192xbf16>
    %c2_93 = arith.constant 2 : index
    %c0_94 = arith.constant 0 : index
    %c0_95 = arith.constant 0 : index
    %96 = vector.load %arg6[%c2_93, %c0_94, %c0_95] : memref<3x192x256xbf16, #tpu.memory_space<vmem>>, vector<1x192x256xbf16>
    %97 = vector.shape_cast %96 : vector<1x192x256xbf16> to vector<192x256xbf16>
    %cst_96 = arith.constant dense<0.000000e+00> : vector<4x256xf32>
    %98 = tpu.matmul %95, %97, %cst_96 {dimension_numbers = #tpu.dot_dimension_numbers<[1], [0], [0], [1], [0, 0, 1, 1], [], []>} : vector<4x192xbf16>, vector<192x256xbf16>, vector<4x256xf32> -> vector<4x256xf32>
    %99 = arith.addf %93, %98 : vector<4x256xf32>
    %cst_97 = arith.constant 0.000000e+00 : f32
    %100 = vector.broadcast %cst_97 : f32 to vector<4x256xf32>
    %101 = arith.maximumf %99, %100 : vector<4x256xf32>
    %102 = vector.extract_strided_slice %101 {offsets = [0, 0], sizes = [4, 128], strides = [1, 1]} : vector<4x256xf32> to vector<4x128xf32>
    %103 = vector.extract_strided_slice %101 {offsets = [0, 128], sizes = [4, 128], strides = [1, 1]} : vector<4x256xf32> to vector<4x128xf32>
    %104 = arith.maximumf %102, %103 : vector<4x128xf32>
    %c0_98 = arith.constant 0 : index
    %c0_99 = arith.constant 0 : index
    %105 = vector.load %arg14[%c0_98, %c0_99] : memref<16x128xf32, #tpu.memory_space<vmem>>, vector<4x128xf32>
    tpu.vector_store %arg14[%c0_98, %c0_99], %104 {strides = array<i32>} : memref<16x128xf32, #tpu.memory_space<vmem>>, vector<4x128xf32>,
    %c0_100 = arith.constant 0 : index
    %c0_101 = arith.constant 0 : index
    %106 = vector.load %arg9[%c0_100, %c0_101] : memref<1x128xf32, #tpu.memory_space<vmem>>, vector<1x128xf32>
    %c0_102 = arith.constant 0 : index
    %c0_103 = arith.constant 0 : index
    %107 = vector.load %arg14[%c0_102, %c0_103] : memref<16x128xf32, #tpu.memory_space<vmem>>, vector<1x128xf32>
    %c1_104 = arith.constant 1 : index
    %c0_105 = arith.constant 0 : index
    %108 = vector.load %arg14[%c1_104, %c0_105] : memref<16x128xf32, #tpu.memory_space<vmem>>, vector<1x128xf32>
    %109 = arith.maximumf %107, %108 : vector<1x128xf32>
    %110 = arith.truncf %109 : vector<1x128xf32> to vector<1x128xbf16>
    %c0_106 = arith.constant 0 : index
    %c0_107 = arith.constant 0 : index
    %c0_108 = arith.constant 0 : index
    %111 = vector.load %arg8[%c0_106, %c0_107, %c0_108] : memref<2x128x128xbf16, #tpu.memory_space<vmem>>, vector<1x128x128xbf16>
    %112 = vector.shape_cast %111 : vector<1x128x128xbf16> to vector<128x128xbf16>
    %cst_109 = arith.constant dense<0.000000e+00> : vector<1x128xf32>
    %113 = tpu.matmul %110, %112, %cst_109 {dimension_numbers = #tpu.dot_dimension_numbers<[1], [0], [0], [1], [0, 0, 1, 1], [], []>} : vector<1x128xbf16>, vector<128x128xbf16>, vector<1x128xf32> -> vector<1x128xf32>
    %114 = arith.addf %106, %113 : vector<1x128xf32>
    %c2_110 = arith.constant 2 : index
    %c0_111 = arith.constant 0 : index
    %115 = vector.load %arg14[%c2_110, %c0_111] : memref<16x128xf32, #tpu.memory_space<vmem>>, vector<1x128xf32>
    %c3 = arith.constant 3 : index
    %c0_112 = arith.constant 0 : index
    %116 = vector.load %arg14[%c3, %c0_112] : memref<16x128xf32, #tpu.memory_space<vmem>>, vector<1x128xf32>
    %117 = arith.maximumf %115, %116 : vector<1x128xf32>
    %118 = arith.truncf %117 : vector<1x128xf32> to vector<1x128xbf16>
    %c1_113 = arith.constant 1 : index
    %c0_114 = arith.constant 0 : index
    %c0_115 = arith.constant 0 : index
    %119 = vector.load %arg8[%c1_113, %c0_114, %c0_115] : memref<2x128x128xbf16, #tpu.memory_space<vmem>>, vector<1x128x128xbf16>
    %120 = vector.shape_cast %119 : vector<1x128x128xbf16> to vector<128x128xbf16>
    %cst_116 = arith.constant dense<0.000000e+00> : vector<1x128xf32>
    %121 = tpu.matmul %118, %120, %cst_116 {dimension_numbers = #tpu.dot_dimension_numbers<[1], [0], [0], [1], [0, 0, 1, 1], [], []>} : vector<1x128xbf16>, vector<128x128xbf16>, vector<1x128xf32> -> vector<1x128xf32>
    %122 = arith.addf %114, %121 : vector<1x128xf32>
    %cst_117 = arith.constant 0.000000e+00 : f32
    %123 = vector.broadcast %cst_117 : f32 to vector<7x128xf32>
    %c1_118 = arith.constant 1 : index
    %c0_119 = arith.constant 0 : index
    %124 = vector.load %arg10[%c1_118, %c0_119] : memref<8x128xf32, #tpu.memory_space<vmem>>, vector<7x128xf32>
    tpu.vector_store %arg10[%c1_118, %c0_119], %123 {strides = array<i32>} : memref<8x128xf32, #tpu.memory_space<vmem>>, vector<7x128xf32>,
    %c0_120 = arith.constant 0 : index
    %c0_121 = arith.constant 0 : index
    %125 = vector.load %arg10[%c0_120, %c0_121] : memref<8x128xf32, #tpu.memory_space<vmem>>, vector<1x128xf32>
    tpu.vector_store %arg10[%c0_120, %c0_121], %122 {strides = array<i32>} : memref<8x128xf32, #tpu.memory_space<vmem>>, vector<1x128xf32>,
    return
  }
  func.func @transform_0(%arg0: i32) -> (i32, i32) {
    %c0_i32 = arith.constant 0 : i32
    %c0_i32_0 = arith.constant 0 : i32
    return %arg0, %c0_i32 : i32, i32
  }
  func.func @transform_1(%arg0: i32) -> (i32, i32, i32) {
    %c0_i32 = arith.constant 0 : i32
    %c0_i32_0 = arith.constant 0 : i32
    %c0_i32_1 = arith.constant 0 : i32
    %c0_i32_2 = arith.constant 0 : i32
    return %c0_i32, %c0_i32_0, %c0_i32_1 : i32, i32, i32
  }
  func.func @transform_2(%arg0: i32) -> (i32, i32) {
    %c0_i32 = arith.constant 0 : i32
    %c0_i32_0 = arith.constant 0 : i32
    %c0_i32_1 = arith.constant 0 : i32
    return %c0_i32, %c0_i32_0 : i32, i32
  }
  func.func @transform_3(%arg0: i32) -> (i32, i32, i32) {
    %c0_i32 = arith.constant 0 : i32
    %c0_i32_0 = arith.constant 0 : i32
    %c0_i32_1 = arith.constant 0 : i32
    %c0_i32_2 = arith.constant 0 : i32
    return %c0_i32, %c0_i32_0, %c0_i32_1 : i32, i32, i32
  }
  func.func @transform_4(%arg0: i32) -> (i32, i32) {
    %c0_i32 = arith.constant 0 : i32
    %c0_i32_0 = arith.constant 0 : i32
    %c0_i32_1 = arith.constant 0 : i32
    return %c0_i32, %c0_i32_0 : i32, i32
  }
  func.func @transform_5(%arg0: i32) -> (i32, i32, i32) {
    %c0_i32 = arith.constant 0 : i32
    %c0_i32_0 = arith.constant 0 : i32
    %c0_i32_1 = arith.constant 0 : i32
    %c0_i32_2 = arith.constant 0 : i32
    return %c0_i32, %c0_i32_0, %c0_i32_1 : i32, i32, i32
  }
  func.func @transform_6(%arg0: i32) -> (i32, i32) {
    %c0_i32 = arith.constant 0 : i32
    %c0_i32_0 = arith.constant 0 : i32
    %c0_i32_1 = arith.constant 0 : i32
    return %c0_i32, %c0_i32_0 : i32, i32
  }
  func.func @transform_7(%arg0: i32) -> (i32, i32, i32) {
    %c0_i32 = arith.constant 0 : i32
    %c0_i32_0 = arith.constant 0 : i32
    %c0_i32_1 = arith.constant 0 : i32
    %c0_i32_2 = arith.constant 0 : i32
    return %c0_i32, %c0_i32_0, %c0_i32_1 : i32, i32, i32
  }
  func.func @transform_8(%arg0: i32) -> (i32, i32) {
    %c0_i32 = arith.constant 0 : i32
    %c0_i32_0 = arith.constant 0 : i32
    %c0_i32_1 = arith.constant 0 : i32
    return %c0_i32, %c0_i32_0 : i32, i32
  }
  func.func @transform_9(%arg0: i32) -> (i32, i32) {
    %c0_i32 = arith.constant 0 : i32
    %c0_i32_0 = arith.constant 0 : i32
    return %arg0, %c0_i32 : i32, i32
  }
}

</mosaic_0001>

<llo_original>
// kernel: tpu_custom_call.1
$region0: #{tpu_custom_call.1}
  #allocation0 [shape = 'u32[]', space=smem, size = 0x4, offset = 0x4, fixed_abs, tag = 'smem constant byte address 0x4 - core index']
  #allocation1 [shape = 'u32[72,128]{1,0:T(1,128)}', space=vmem, size = 0x9000, scoped, tag = 'internal scratch']
  #allocation2 [shape = 'f32[32,72]{1,0:T(8,128)}', space=vmem, size = 0x4000, scoped, tag = 'scratch operand']
  #allocation3 [shape = 'f32[24,160]{1,0:T(8,128)}', space=vmem, size = 0x6000, scoped, tag = 'scratch operand']
  #allocation4 [shape = 'f32[16,192]{1,0:T(8,128)}', space=vmem, size = 0x4000, scoped, tag = 'scratch operand']
  #allocation5 [shape = 'f32[16,128]{1,0:T(8,128)}', space=vmem, size = 0x2000, scoped, tag = 'scratch operand']
  %s0 = inlined_call_operand.hbm [shape: f32[32,64], index: 0, kind: input, shape index: {}]
  %s1 = inlined_call_operand.hbm [shape: bf16[3,72,256], index: 1, kind: input, shape index: {}]
  %s2 = inlined_call_operand.hbm [shape: f32[1,256], index: 2, kind: input, shape index: {}]
  %s3 = inlined_call_operand.hbm [shape: bf16[3,160,256], index: 3, kind: input, shape index: {}]
  %s4 = inlined_call_operand.vmem [shape: f32[1,256], index: 4, kind: input, shape index: {}]
  %s5 = inlined_call_operand.hbm [shape: bf16[3,192,256], index: 5, kind: input, shape index: {}]
  %s6 = inlined_call_operand.vmem [shape: f32[1,256], index: 6, kind: input, shape index: {}]
  %s7 = inlined_call_operand.hbm [shape: bf16[2,128,128], index: 7, kind: input, shape index: {}]
  %s8 = inlined_call_operand.vmem [shape: f32[1,128], index: 8, kind: input, shape index: {}]
  %s9 = inlined_call_operand.hbm [shape: f32[16,128], index: 9, kind: output, shape index: {}]
  %s10 = sld [smem:[#allocation0]]
  $region93: #{tpu_custom_call.1} parent=0
    _
  %s12 = ssub.s32 1, %s10
  %s13 = scalar_select 0, %s12, %s10
  $region1: #{tpu_custom_call.1} parent=0
    #allocation6 [shape = 'u8[16384]{0}', space=vmem, size = 0x4000, scoped, tag = 'input window, operand 0']
    #allocation7 [shape = 's32[2]{0}', space=sflag, size = 0x8, scoped, tag = 'scoped memory for tpu_custom_call.1']
    #allocation8 [shape = 's32[2]{0}', space=sflag, size = 0x8, scoped, tag = 'scoped memory for tpu_custom_call.1']
    #allocation9 [shape = 'u8[110592]{0}', space=vmem, size = 0x1b000, scoped, tag = 'input window, operand 1, single buffered']
    #allocation10 [shape = 's32[1]{0}', space=sflag, size = 0x4, scoped, tag = 'scoped memory for tpu_custom_call.1']
    #allocation11 [shape = 'u8[1024]{0}', space=vmem, size = 0x400, scoped, tag = 'input window, operand 2, single buffered']
    #allocation12 [shape = 'u8[245760]{0}', space=vmem, size = 0x3c000, scoped, tag = 'input window, operand 3, single buffered']
    #allocation13 [shape = 's32[1]{0}', space=sflag, size = 0x4, scoped, tag = 'scoped memory for tpu_custom_call.1']
    #allocation14 [shape = 'u8[294912]{0}', space=vmem, size = 0x48000, scoped, tag = 'input window, operand 5, single buffered']
    #allocation15 [shape = 'u8[65536]{0}', space=vmem, size = 0x10000, scoped, tag = 'input window, operand 7, single buffered']
    #allocation16 [shape = 's32[1]{0}', space=sflag, size = 0x4, scoped, tag = 'scoped memory for tpu_custom_call.1']
    #allocation17 [shape = 'u8[8192]{0}', space=vmem, size = 0x2000, scoped, tag = 'output window, operand 0']
    %14 = vsyncpa [#allocation7], 0
    %s15 = scalar_lea.sflag [#allocation7], 1
    %16 = vsyncpa %s15, 0
    %17 = vsyncpa [#allocation10], 0
    %18 = vsyncpa [#allocation13], 0
    %19 = vsyncpa [#allocation16], 0
    %20 = vsyncpa [#allocation8], 0
    %s21 = scalar_lea.sflag [#allocation8], 1
    %22 = vsyncpa %s21, 0
    loop: start=0, step=1, limit=4
    $region2: #{tpu_custom_call.1} parent=1 // loop_pre_header
      _
    $region3: #{tpu_custom_call.1} parent=1 // loop_header
      %s24 = sphi 0, %s28
      %p25 = scmp.ge.s32.totalorder %s24, 4
      %s34 = sphi 0, %s36
      %s37 = sphi 0, %s34
      %s38 = sphi 0, %s37
      %s54 = sphi 0, %s38
      %s58 = sphi 0, %s58
      %s60 = sphi 0, %s58
      %s61 = sphi 0, %s60
      %s75 = sphi 0, %s61
      %s79 = sphi 0, %s79
      %s81 = sphi 0, %s79
      %s82 = sphi 0, %s81
      %s96 = sphi 0, %s82
      %s100 = sphi 0, %s100
      %s102 = sphi 0, %s100
      %s103 = sphi 0, %s102
      %s117 = sphi 0, %s103
      %s121 = sphi 0, %s121
      %s123 = sphi 0, %s121
      %s124 = sphi 0, %s123
      %s138 = sphi 0, %s124
      %s142 = sphi 0, %s142
      %s144 = sphi 0, %s142
      %s145 = sphi 0, %s144
      %s159 = sphi 0, %s145
      %s163 = sphi 0, %s163
      %s165 = sphi 0, %s163
      %s166 = sphi 0, %s165
      %s180 = sphi 0, %s166
      %s184 = sphi 0, %s184
      %s186 = sphi 0, %s184
      %s187 = sphi 0, %s186
      %s201 = sphi 0, %s187
      %s205 = sphi 0, %s205
      %s207 = sphi 0, %s205
      %s208 = sphi 0, %s207
      %s222 = sphi 0, %s208
      %s228 = sphi 0, %s230
      %s231 = sphi 0, %s228
      %s232 = sphi 0, %s231
      %s248 = sphi 0, %s232
    $region4: #{tpu_custom_call.1} parent=1 // loop_header_branch
      %27 = sbr.rel (%p25) target = $region8
    $region5: #{tpu_custom_call.1} parent=1 // loop_body
      %s29 = ssub.s32 %s24, 1
      %s30 = ssub.s32 %s24, 2
      %s31 = sadd.s32 %s24, 1
      %s32 = ssub.s32 %s24, %s31
      %p33 = scmp.eq.s32.totalorder %s32, 0
      %s35 = sadd.s32 %s34, 1
      %s36 = scalar_select %p33, %s34, %s35
      %p39 = pneg %p33
      %p40 = scmp.eq.s32.totalorder %s24, 1
      %p41 = por %p39, %p40
      %p42 = scmp.ne.s32.totalorder %s34, %s37
      %p43 = scmp.eq.s32.totalorder %s24, 0
      %p44 = por %p42, %p43
      %p45 = scmp.ne.s32.totalorder %s34, %s37
      %p46 = scmp.eq.s32.totalorder %s29, 1
      %p47 = por %p45, %p46
      %p48 = scmp.ne.s32.totalorder %s37, %s38
      %p49 = scmp.eq.s32.totalorder %s29, 0
      %p50 = por %p48, %p49
      %p51 = scmp.ne.s32.totalorder %s37, %s38
      %p52 = scmp.eq.s32.totalorder %s30, 1
      %p53 = por %p51, %p52
      %p55 = scmp.ne.s32.totalorder %s38, %s54
      %p56 = scmp.eq.s32.totalorder %s30, 0
      %p57 = por %p55, %p56
      %s59 = sadd.s32 %s58, 1
      %p62 = scmp.eq.s32.totalorder %s24, 1
      %p63 = scmp.ne.s32.totalorder %s58, %s60
      %p64 = scmp.eq.s32.totalorder %s24, 0
      %p65 = por %p63, %p64
      %p66 = scmp.ne.s32.totalorder %s58, %s60
      %p67 = scmp.eq.s32.totalorder %s29, 1
      %p68 = por %p66, %p67
      %p69 = scmp.ne.s32.totalorder %s60, %s61
      %p70 = scmp.eq.s32.totalorder %s29, 0
      %p71 = por %p69, %p70
      %p72 = scmp.ne.s32.totalorder %s60, %s61
      %p73 = scmp.eq.s32.totalorder %s30, 1
      %p74 = por %p72, %p73
      %p76 = scmp.ne.s32.totalorder %s61, %s75
      %p77 = scmp.eq.s32.totalorder %s30, 0
      %p78 = por %p76, %p77
      %s80 = sadd.s32 %s79, 1
      %p83 = scmp.eq.s32.totalorder %s24, 1
      %p84 = scmp.ne.s32.totalorder %s79, %s81
      %p85 = scmp.eq.s32.totalorder %s24, 0
      %p86 = por %p84, %p85
      %p87 = scmp.ne.s32.totalorder %s79, %s81
      %p88 = scmp.eq.s32.totalorder %s29, 1
      %p89 = por %p87, %p88
      %p90 = scmp.ne.s32.totalorder %s81, %s82
      %p91 = scmp.eq.s32.totalorder %s29, 0
      %p92 = por %p90, %p91
      %p93 = scmp.ne.s32.totalorder %s81, %s82
      %p94 = scmp.eq.s32.totalorder %s30, 1
      %p95 = por %p93, %p94
      %p97 = scmp.ne.s32.totalorder %s82, %s96
      %p98 = scmp.eq.s32.totalorder %s30, 0
      %p99 = por %p97, %p98
      %s101 = sadd.s32 %s100, 1
      %p104 = scmp.eq.s32.totalorder %s24, 1
      %p105 = scmp.ne.s32.totalorder %s100, %s102
      %p106 = scmp.eq.s32.totalorder %s24, 0
      %p107 = por %p105, %p106
      %p108 = scmp.ne.s32.totalorder %s100, %s102
      %p109 = scmp.eq.s32.totalorder %s29, 1
      %p110 = por %p108, %p109
      %p111 = scmp.ne.s32.totalorder %s102, %s103
      %p112 = scmp.eq.s32.totalorder %s29, 0
      %p113 = por %p111, %p112
      %p114 = scmp.ne.s32.totalorder %s102, %s103
      %p115 = scmp.eq.s32.totalorder %s30, 1
      %p116 = por %p114, %p115
      %p118 = scmp.ne.s32.totalorder %s103, %s117
      %p119 = scmp.eq.s32.totalorder %s30, 0
      %p120 = por %p118, %p119
      %s122 = sadd.s32 %s121, 1
      %p125 = scmp.eq.s32.totalorder %s24, 1
      %p126 = scmp.ne.s32.totalorder %s121, %s123
      %p127 = scmp.eq.s32.totalorder %s24, 0
      %p128 = por %p126, %p127
      %p129 = scmp.ne.s32.totalorder %s121, %s123
      %p130 = scmp.eq.s32.totalorder %s29, 1
      %p131 = por %p129, %p130
      %p132 = scmp.ne.s32.totalorder %s123, %s124
      %p133 = scmp.eq.s32.totalorder %s29, 0
      %p134 = por %p132, %p133
      %p135 = scmp.ne.s32.totalorder %s123, %s124
      %p136 = scmp.eq.s32.totalorder %s30, 1
      %p137 = por %p135, %p136
      %p139 = scmp.ne.s32.totalorder %s124, %s138
      %p140 = scmp.eq.s32.totalorder %s30, 0
      %p141 = por %p139, %p140
      %s143 = sadd.s32 %s142, 1
      %p146 = scmp.eq.s32.totalorder %s24, 1
      %p147 = scmp.ne.s32.totalorder %s142, %s144
      %p148 = scmp.eq.s32.totalorder %s24, 0
      %p149 = por %p147, %p148
      %p150 = scmp.ne.s32.totalorder %s142, %s144
      %p151 = scmp.eq.s32.totalorder %s29, 1
      %p152 = por %p150, %p151
      %p153 = scmp.ne.s32.totalorder %s144, %s145
      %p154 = scmp.eq.s32.totalorder %s29, 0
      %p155 = por %p153, %p154
      %p156 = scmp.ne.s32.totalorder %s144, %s145
      %p157 = scmp.eq.s32.totalorder %s30, 1
      %p158 = por %p156, %p157
      %p160 = scmp.ne.s32.totalorder %s145, %s159
      %p161 = scmp.eq.s32.totalorder %s30, 0
      %p162 = por %p160, %p161
      %s164 = sadd.s32 %s163, 1
      %p167 = scmp.eq.s32.totalorder %s24, 1
      %p168 = scmp.ne.s32.totalorder %s163, %s165
      %p169 = scmp.eq.s32.totalorder %s24, 0
      %p170 = por %p168, %p169
      %p171 = scmp.ne.s32.totalorder %s163, %s165
      %p172 = scmp.eq.s32.totalorder %s29, 1
      %p173 = por %p171, %p172
      %p174 = scmp.ne.s32.totalorder %s165, %s166
      %p175 = scmp.eq.s32.totalorder %s29, 0
      %p176 = por %p174, %p175
      %p177 = scmp.ne.s32.totalorder %s165, %s166
      %p178 = scmp.eq.s32.totalorder %s30, 1
      %p179 = por %p177, %p178
      %p181 = scmp.ne.s32.totalorder %s166, %s180
      %p182 = scmp.eq.s32.totalorder %s30, 0
      %p183 = por %p181, %p182
      %s185 = sadd.s32 %s184, 1
      %p188 = scmp.eq.s32.totalorder %s24, 1
      %p189 = scmp.ne.s32.totalorder %s184, %s186
      %p190 = scmp.eq.s32.totalorder %s24, 0
      %p191 = por %p189, %p190
      %p192 = scmp.ne.s32.totalorder %s184, %s186
      %p193 = scmp.eq.s32.totalorder %s29, 1
      %p194 = por %p192, %p193
      %p195 = scmp.ne.s32.totalorder %s186, %s187
      %p196 = scmp.eq.s32.totalorder %s29, 0
      %p197 = por %p195, %p196
      %p198 = scmp.ne.s32.totalorder %s186, %s187
      %p199 = scmp.eq.s32.totalorder %s30, 1
      %p200 = por %p198, %p199
      %p202 = scmp.ne.s32.totalorder %s187, %s201
      %p203 = scmp.eq.s32.totalorder %s30, 0
      %p204 = por %p202, %p203
      %s206 = sadd.s32 %s205, 1
      %p209 = scmp.eq.s32.totalorder %s24, 1
      %p210 = scmp.ne.s32.totalorder %s205, %s207
      %p211 = scmp.eq.s32.totalorder %s24, 0
      %p212 = por %p210, %p211
      %p213 = scmp.ne.s32.totalorder %s205, %s207
      %p214 = scmp.eq.s32.totalorder %s29, 1
      %p215 = por %p213, %p214
      %p216 = scmp.ne.s32.totalorder %s207, %s208
      %p217 = scmp.eq.s32.totalorder %s29, 0
      %p218 = por %p216, %p217
      %p219 = scmp.ne.s32.totalorder %s207, %s208
      %p220 = scmp.eq.s32.totalorder %s30, 1
      %p221 = por %p219, %p220
      %p223 = scmp.ne.s32.totalorder %s208, %s222
      %p224 = scmp.eq.s32.totalorder %s30, 0
      %p225 = por %p223, %p224
      %s226 = ssub.s32 %s24, %s31
      %p227 = scmp.eq.s32.totalorder %s226, 0
      %s229 = sadd.s32 %s228, 1
      %s230 = scalar_select %p227, %s228, %s229
      %p233 = pneg %p227
      %p234 = scmp.eq.s32.totalorder %s24, 1
      %p235 = por %p233, %p234
      %p236 = scmp.ne.s32.totalorder %s228, %s231
      %p237 = scmp.eq.s32.totalorder %s24, 0
      %p238 = por %p236, %p237
      %p239 = scmp.ne.s32.totalorder %s228, %s231
      %p240 = scmp.eq.s32.totalorder %s29, 1
      %p241 = por %p239, %p240
      %p242 = scmp.ne.s32.totalorder %s231, %s232
      %p243 = scmp.eq.s32.totalorder %s29, 0
      %p244 = por %p242, %p243
      %p245 = scmp.ne.s32.totalorder %s231, %s232
      %p246 = scmp.eq.s32.totalorder %s30, 1
      %p247 = por %p245, %p246
      %p249 = scmp.ne.s32.totalorder %s232, %s248
      %p250 = scmp.eq.s32.totalorder %s30, 0
      %p251 = por %p249, %p250
      %p252 = scmp.le.s32.totalorder 1, %s24
      %p253 = scmp.lt.s32.totalorder %s24, 3
      %p254 = pnand %p252, %p253
      %p255 = pneg %p254
      // Predicated region
      $region9: #{tpu_custom_call.1} parent=5 // pred_check
        _
      $region10: #{tpu_custom_call.1} parent=5 // pred_check_branch
        %257 = sbr.rel (%p254) target = $region12
      $region11: #{tpu_custom_call.1} parent=5 // pred_region
        %s258 = ssub.s32 %s24, 1
        // Predicated region
        $region13: #{tpu_custom_call.1} parent=11 // pred_check
          %p259 = pneg %p71
        $region14: #{tpu_custom_call.1} parent=11 // pred_check_branch
          %261 = sbr.rel (%p259) target = $region16
        $region15: #{tpu_custom_call.1} parent=11 // pred_region
          %263 = vsyncadd [#allocation10], 0
          %s264 = sshll.u32 %s1, 4
          %s265 = int_to_ptr.hbm [resolvable:$true] %s264
          %s266 = sshll.u32 [#allocation9], 4
          %s267 = int_to_ptr.vmem [resolvable:$true] %s266
          %272 = dma.hbm_to_vmem [thread:$0]  %s265, 3456, %s267, [#allocation10], 128, 128, 8
        $region16: #{tpu_custom_call.1} parent=11 // pred_fallthru
          _
        // Predicated region
        $region17: #{tpu_custom_call.1} parent=11 // pred_check
          %p273 = pneg %p92
        $region18: #{tpu_custom_call.1} parent=11 // pred_check_branch
          %275 = sbr.rel (%p273) target = $region20
        $region19: #{tpu_custom_call.1} parent=11 // pred_region
          %277 = vsyncadd [#allocation10], 0
          %s279 = sshll.u32 %s2, 4
          %s280 = int_to_ptr.hbm [resolvable:$true] %s279
          %s281 = sshll.u32 [#allocation11], 4
          %s282 = int_to_ptr.vmem [resolvable:$true] %s281
          %284 = dma.hbm_to_vmem [thread:$0]  %s280, 32, %s282, [#allocation10]
        $region20: #{tpu_custom_call.1} parent=11 // pred_fallthru
          _
        // Predicated region
        $region21: #{tpu_custom_call.1} parent=11 // pred_check
          %p285 = pneg %p113
        $region22: #{tpu_custom_call.1} parent=11 // pred_check_branch
          %287 = sbr.rel (%p285) target = $region24
        $region23: #{tpu_custom_call.1} parent=11 // pred_region
          %289 = vsyncadd [#allocation13], 0
          %s290 = sshll.u32 %s3, 4
          %s291 = int_to_ptr.hbm [resolvable:$true] %s290
          %s292 = sshll.u32 [#allocation12], 4
          %s293 = int_to_ptr.vmem [resolvable:$true] %s292
          %298 = dma.hbm_to_vmem [thread:$0]  %s291, 7680, %s293, [#allocation13], 128, 128, 8
        $region24: #{tpu_custom_call.1} parent=11 // pred_fallthru
          _
        // Predicated region
        $region25: #{tpu_custom_call.1} parent=11 // pred_check
          %p299 = pneg %p134
        $region26: #{tpu_custom_call.1} parent=11 // pred_check_branch
          %301 = sbr.rel (%p299) target = $region28
        $region27: #{tpu_custom_call.1} parent=11 // pred_region
          _
        $region28: #{tpu_custom_call.1} parent=11 // pred_fallthru
          _
        // Predicated region
        $region29: #{tpu_custom_call.1} parent=11 // pred_check
          %p302 = pneg %p155
        $region30: #{tpu_custom_call.1} parent=11 // pred_check_branch
          %304 = sbr.rel (%p302) target = $region32
        $region31: #{tpu_custom_call.1} parent=11 // pred_region
          %306 = vsyncadd [#allocation13], 0
          %s307 = sshll.u32 %s5, 4
          %s308 = int_to_ptr.hbm [resolvable:$true] %s307
          %s309 = sshll.u32 [#allocation14], 4
          %s310 = int_to_ptr.vmem [resolvable:$true] %s309
          %315 = dma.hbm_to_vmem [thread:$0]  %s308, 9216, %s310, [#allocation13], 128, 128, 8
        $region32: #{tpu_custom_call.1} parent=11 // pred_fallthru
          _
        // Predicated region
        $region33: #{tpu_custom_call.1} parent=11 // pred_check
          %p316 = pneg %p176
        $region34: #{tpu_custom_call.1} parent=11 // pred_check_branch
          %318 = sbr.rel (%p316) target = $region36
        $region35: #{tpu_custom_call.1} parent=11 // pred_region
          _
        $region36: #{tpu_custom_call.1} parent=11 // pred_fallthru
          _
        // Predicated region
        $region37: #{tpu_custom_call.1} parent=11 // pred_check
          %p319 = pneg %p197
        $region38: #{tpu_custom_call.1} parent=11 // pred_check_branch
          %321 = sbr.rel (%p319) target = $region40
        $region39: #{tpu_custom_call.1} parent=11 // pred_region
          %323 = vsyncadd [#allocation16], 0
          %s324 = sshll.u32 %s7, 4
          %s325 = int_to_ptr.hbm [resolvable:$true] %s324
          %s326 = sshll.u32 [#allocation15], 4
          %s327 = int_to_ptr.vmem [resolvable:$true] %s326
          %332 = dma.hbm_to_vmem [thread:$0]  %s325, 2048, %s327, [#allocation16], 64, 64, 4
        $region40: #{tpu_custom_call.1} parent=11 // pred_fallthru
          _
        // Predicated region
        $region41: #{tpu_custom_call.1} parent=11 // pred_check
          %p333 = pneg %p218
        $region42: #{tpu_custom_call.1} parent=11 // pred_check_branch
          %335 = sbr.rel (%p333) target = $region44
        $region43: #{tpu_custom_call.1} parent=11 // pred_region
          _
        $region44: #{tpu_custom_call.1} parent=11 // pred_fallthru
          _
      $region12: #{tpu_custom_call.1} parent=5 // pred_fallthru
        _
      %p336 = scmp.lt.s32.totalorder %s24, 2
      // Predicated region
      $region45: #{tpu_custom_call.1} parent=5 // pred_check
        %p337 = pneg %p336
      $region46: #{tpu_custom_call.1} parent=5 // pred_check_branch
        %339 = sbr.rel (%p337) target = $region48
      $region47: #{tpu_custom_call.1} parent=5 // pred_region
        // Predicated region
        $region49: #{tpu_custom_call.1} parent=47 // pred_check
          %p340 = pneg %p44
        $region50: #{tpu_custom_call.1} parent=47 // pred_check_branch
          %342 = sbr.rel (%p340) target = $region52
        $region51: #{tpu_custom_call.1} parent=47 // pred_region
          %s343 = sand.u32 %s34, 1
          %s344 = scalar_lea.sflag [#allocation7], %s343
          %s345 = sand.u32 %s34, 1
          %s346 = smul.addr %s345, 16
          %s347 = scalar_lea.vmem [#allocation6], %s346
          %s348 = smul.u32 2, %s24
          %350 = vsyncadd %s344, 0
          %s351 = smul.addr %s348, 8
          %s352 = scalar_lea.hbm %s0, %s351
          %s353 = sshll.u32 %s352, 4
          %s354 = int_to_ptr.hbm [resolvable:$true] %s353
          %s355 = sshll.u32 %s347, 4
          %s356 = int_to_ptr.vmem [resolvable:$true] %s355
          %361 = dma.hbm_to_vmem [thread:$0]  %s354, 256, %s356, %s344, 128, 128, 8
        $region52: #{tpu_custom_call.1} parent=47 // pred_fallthru
          _
      $region48: #{tpu_custom_call.1} parent=5 // pred_fallthru
        _
      %p362 = scmp.le.s32.totalorder 1, %s24
      %p363 = scmp.lt.s32.totalorder %s24, 3
      %p364 = pnand %p362, %p363
      %p365 = pneg %p364
      // Predicated region
      $region53: #{tpu_custom_call.1} parent=5 // pred_check
        _
      $region54: #{tpu_custom_call.1} parent=5 // pred_check_branch
        %367 = sbr.rel (%p364) target = $region56
      $region55: #{tpu_custom_call.1} parent=5 // pred_region
        %s368 = ssub.s32 %s24, 1
        %s369 = sand.u32 %s37, 1
        %s370 = scalar_lea.sflag [#allocation7], %s369
        %s371 = sand.u32 %s37, 1
        %s372 = smul.addr %s371, 16
        %s373 = scalar_lea.vmem [#allocation6], %s372
        // Predicated region
        $region57: #{tpu_custom_call.1} parent=55 // pred_check
          %p374 = pneg %p50
        $region58: #{tpu_custom_call.1} parent=55 // pred_check_branch
          %376 = sbr.rel (%p374) target = $region60
        $region59: #{tpu_custom_call.1} parent=55 // pred_region
          %378 = dma.done %s370, 256
        $region60: #{tpu_custom_call.1} parent=55 // pred_fallthru
          _
        // Predicated region
        $region61: #{tpu_custom_call.1} parent=55 // pred_check
          %p379 = pneg %p71
        $region62: #{tpu_custom_call.1} parent=55 // pred_check_branch
          %381 = sbr.rel (%p379) target = $region64
        $region63: #{tpu_custom_call.1} parent=55 // pred_region
          %383 = dma.done [#allocation10], 3456
        $region64: #{tpu_custom_call.1} parent=55 // pred_fallthru
          _
        // Predicated region
        $region65: #{tpu_custom_call.1} parent=55 // pred_check
          %p384 = pneg %p92
        $region66: #{tpu_custom_call.1} parent=55 // pred_check_branch
          %386 = sbr.rel (%p384) target = $region68
        $region67: #{tpu_custom_call.1} parent=55 // pred_region
          %388 = dma.done [#allocation10], 32
        $region68: #{tpu_custom_call.1} parent=55 // pred_fallthru
          _
        // Predicated region
        $region69: #{tpu_custom_call.1} parent=55 // pred_check
          %p389 = pneg %p113
        $region70: #{tpu_custom_call.1} parent=55 // pred_check_branch
          %391 = sbr.rel (%p389) target = $region72
        $region71: #{tpu_custom_call.1} parent=55 // pred_region
          %393 = dma.done [#allocation13], 7680
        $region72: #{tpu_custom_call.1} parent=55 // pred_fallthru
          _
        // Predicated region
        $region73: #{tpu_custom_call.1} parent=55 // pred_check
          %p394 = pneg %p155
        $region74: #{tpu_custom_call.1} parent=55 // pred_check_branch
          %396 = sbr.rel (%p394) target = $region76
        $region75: #{tpu_custom_call.1} parent=55 // pred_region
          %398 = dma.done [#allocation13], 9216
        $region76: #{tpu_custom_call.1} parent=55 // pred_fallthru
          _
        // Predicated region
        $region77: #{tpu_custom_call.1} parent=55 // pred_check
          %p399 = pneg %p197
        $region78: #{tpu_custom_call.1} parent=55 // pred_check_branch
          %401 = sbr.rel (%p399) target = $region80
        $region79: #{tpu_custom_call.1} parent=55 // pred_region
          %403 = dma.done [#allocation16], 2048
        $region80: #{tpu_custom_call.1} parent=55 // pred_fallthru
          _
        %s404 = sand.u32 %s37, 1
        %s405 = scalar_lea.sflag [#allocation7], %s404
        %s406 = sand.u32 %s37, 1
        %s407 = smul.addr %s406, 16
        %s408 = scalar_lea.vmem [#allocation6], %s407
        %p409 = pneg %p50
        %p410 = pneg %p47
        %p411 = pneg %p71
        %p412 = pneg %p68
        %p413 = pneg %p92
        %p414 = pneg %p89
        %p415 = pneg %p113
        %p416 = pneg %p110
        %p417 = pneg %p134
        %p418 = pneg %p131
        %p419 = pneg %p155
        %p420 = pneg %p152
        %p421 = pneg %p176
        %p422 = pneg %p173
        %p423 = pneg %p197
        %p424 = pneg %p194
        %p425 = pneg %p218
        %p426 = pneg %p215
        %p427 = pneg %p244
        %p428 = pneg %p241
        %s429 = sand.u32 %s231, 1
        %s430 = scalar_lea.sflag [#allocation8], %s429
        %s431 = sand.u32 %s231, 1
        %s432 = smul.addr %s431, 8
        %s433 = scalar_lea.vmem [#allocation17], %s432
        %s434 = smul.u32 2, %s29
        %vm436 = vcmask 588800
        %437 = vst.msk [vmem:[#allocation2] sm:$0xff] %vm436, 0.0
        %438 = vst.msk [vmem:[#allocation2 + $0x18] sm:$0xff] %vm436, 0.0
        %vm439 = vcmask 589312
        %440 = vst.msk [vmem:[#allocation2] sm:$0xff] %vm439, 0.0
        %441 = vst.msk [vmem:[#allocation2 + $0x8] sm:$0xff] %vm439, 0.0
        %442 = vst.msk [vmem:[#allocation2 + $0x10] sm:$0xff] %vm439, 0.0
        %443 = vst.msk [vmem:[#allocation2 + $0x18] sm:$0xff] %vm439, 0.0
        %v444 = vld [vmem:[%s373] sm:$0xff]
        %v445 = vld [vmem:[%s373 + $0x8] sm:$0xff]
        %vm446 = vcmask 523264
        %447 = vst.msk [vmem:[#allocation2 + $0x8] sm:$0xff] %vm446, %v444
        %448 = vst.msk [vmem:[#allocation2 + $0x10] sm:$0xff] %vm446, %v445
        %v449 = vld [vmem:[#allocation2 + $0x7] sm:$0xff]
        %v450 = vld [vmem:[#allocation2 + $0xf] sm:$0xff]
        %v451 = vpack.c.bf16 %v450, %v449
        %v452 = vld [vmem:[#allocation9] sm:$0xff]
        %v453 = vld [vmem:[#allocation9 + $0x8] sm:$0xff]
        %v454 = vld [vmem:[#allocation9 + $0x10] sm:$0xff]
        %v455 = vld [vmem:[#allocation9 + $0x18] sm:$0xff]
        %v456 = vld [vmem:[#allocation9 + $0x20] sm:$0xff]
        %v457 = vld [vmem:[#allocation9 + $0x28] sm:$0xff]
        %v458 = vld [vmem:[#allocation9 + $0x30] sm:$0xff]
        %v459 = vld [vmem:[#allocation9 + $0x38] sm:$0xff]
        %v460 = vld [vmem:[#allocation9 + $0x40] sm:$0xff]
        %v461 = vld [vmem:[#allocation11] sm:$0x3]
        %v463 = vperm.slane %v461, 0
        %v464 = vperm.slane %v461, 1
        %v476 = vunpack.c.l.b16 %v452
        %v477 = vunpack.c.h.b16 %v452
        %v478 = vunpack.c.l.b16 %v453
        %v479 = vunpack.c.h.b16 %v453
        %v480 = vunpack.c.l.b16 %v454
        %v481 = vunpack.c.h.b16 %v454
        %v482 = vunpack.c.l.b16 %v455
        %v483 = vunpack.c.h.b16 %v455
        %v484 = vunpack.c.l.b16 %v456
        %v485 = vunpack.c.h.b16 %v456
        %v486 = vunpack.c.l.b16 %v457
        %v487 = vunpack.c.h.b16 %v457
        %v488 = vunpack.c.l.b16 %v458
        %v489 = vunpack.c.h.b16 %v458
        %v490 = vunpack.c.l.b16 %v459
        %v491 = vunpack.c.h.b16 %v459
        %v492 = vunpack.c.l.b16 %v460
        %v493 = vunpack.c.h.b16 %v460
        %v494 = vpack.c.b16 %v478, %v476
        %v495 = vpack.c.b16 %v479, %v477
        %v496 = vpack.c.b16 %v482, %v480
        %v497 = vpack.c.b16 %v483, %v481
        %v498 = vpack.c.b16 %v486, %v484
        %v499 = vpack.c.b16 %v487, %v485
        %v500 = vpack.c.b16 %v490, %v488
        %v501 = vpack.c.b16 %v491, %v489
        %v502 = vpack.c.b16 %v492, %v492
        %v503 = vpack.c.b16 %v493, %v493
        %v513 = vsel %vm436, %v451, 0
        %vm515 = vcmask 1043456
        %v517 = vsel %vm515, %v502, 0
        %v520 = vsel %vm515, %v503, 0
        %522 = vmatpush.bf16.msra.mxu0 0
        %523 = vmatpush.bf16.msra.mxu0 0
        %524 = vmatpush.bf16.msra.mxu0 0
        %525 = vmatpush.bf16.msra.mxu0 %v517
        %526 = vmatpush.bf16.msra.mxu0 %v500
        %527 = vmatpush.bf16.msra.mxu0 %v498
        %528 = vmatpush.bf16.msra.mxu0 %v496
        %529 = vmatpush.bf16.msra.mxu0 %v494
        %530 = vmatmul.bf16.gmra.mxu0 %v513
        %v531 = vpop.f32.mrf.mxu0
        %v532 = vadd.f32 %v463, %v531
        %v533 = vpop.f32.mrf.mxu0
        %v534 = vadd.f32 %v463, %v533
        %535 = vdwg.mxu0
        %536 = vmatpush.bf16.msra.mxu0 0
        %537 = vmatpush.bf16.msra.mxu0 0
        %538 = vmatpush.bf16.msra.mxu0 0
        %539 = vmatpush.bf16.msra.mxu0 %v520
        %540 = vmatpush.bf16.msra.mxu0 %v501
        %541 = vmatpush.bf16.msra.mxu0 %v499
        %542 = vmatpush.bf16.msra.mxu0 %v497
        %543 = vmatpush.bf16.msra.mxu0 %v495
        %544 = vmatmul.bf16.gmra.mxu0 %v513
        %v545 = vpop.f32.mrf.mxu0
        %v546 = vadd.f32 %v464, %v545
        %v547 = vpop.f32.mrf.mxu0
        %v548 = vadd.f32 %v464, %v547
        %549 = vdwg.mxu0
        %v550 = vld [vmem:[#allocation2 + $0x8] sm:$0xff]
        %v551 = vld [vmem:[#allocation2 + $0x10] sm:$0xff]
        %v552 = vpack.c.bf16 %v551, %v550
        %s553 = scalar_lea.vmem [#allocation9], 72
        %v554 = vld [vmem:[%s553] sm:$0xff]
        %v555 = vld [vmem:[%s553 + $0x8] sm:$0xff]
        %v556 = vld [vmem:[%s553 + $0x10] sm:$0xff]
        %v557 = vld [vmem:[%s553 + $0x18] sm:$0xff]
        %v558 = vld [vmem:[%s553 + $0x20] sm:$0xff]
        %v559 = vld [vmem:[%s553 + $0x28] sm:$0xff]
        %v560 = vld [vmem:[%s553 + $0x30] sm:$0xff]
        %v561 = vld [vmem:[%s553 + $0x38] sm:$0xff]
        %v562 = vld [vmem:[%s553 + $0x40] sm:$0xff]
        %v572 = vunpack.c.l.b16 %v554
        %v573 = vunpack.c.h.b16 %v554
        %v574 = vunpack.c.l.b16 %v555
        %v575 = vunpack.c.h.b16 %v555
        %v576 = vunpack.c.l.b16 %v556
        %v577 = vunpack.c.h.b16 %v556
        %v578 = vunpack.c.l.b16 %v557
        %v579 = vunpack.c.h.b16 %v557
        %v580 = vunpack.c.l.b16 %v558
        %v581 = vunpack.c.h.b16 %v558
        %v582 = vunpack.c.l.b16 %v559
        %v583 = vunpack.c.h.b16 %v559
        %v584 = vunpack.c.l.b16 %v560
        %v585 = vunpack.c.h.b16 %v560
        %v586 = vunpack.c.l.b16 %v561
        %v587 = vunpack.c.h.b16 %v561
        %v588 = vunpack.c.l.b16 %v562
        %v589 = vunpack.c.h.b16 %v562
        %v590 = vpack.c.b16 %v574, %v572
        %v591 = vpack.c.b16 %v575, %v573
        %v592 = vpack.c.b16 %v578, %v576
        %v593 = vpack.c.b16 %v579, %v577
        %v594 = vpack.c.b16 %v582, %v580
        %v595 = vpack.c.b16 %v583, %v581
        %v596 = vpack.c.b16 %v586, %v584
        %v597 = vpack.c.b16 %v587, %v585
        %v598 = vpack.c.b16 %v588, %v588
        %v599 = vpack.c.b16 %v589, %v589
        %v609 = vsel %vm436, %v552, 0
        %v612 = vsel %vm515, %v598, 0
        %v615 = vsel %vm515, %v599, 0
        %617 = vmatpush.bf16.msra.mxu0 0
        %618 = vmatpush.bf16.msra.mxu0 0
        %619 = vmatpush.bf16.msra.mxu0 0
        %620 = vmatpush.bf16.msra.mxu0 %v612
        %621 = vmatpush.bf16.msra.mxu0 %v596
        %622 = vmatpush.bf16.msra.mxu0 %v594
        %623 = vmatpush.bf16.msra.mxu0 %v592
        %624 = vmatpush.bf16.msra.mxu0 %v590
        %625 = vmatmul.bf16.gmra.mxu0 %v609
        %v626 = vpop.f32.mrf.mxu0
        %v627 = vadd.f32 0.0, %v626
        %v628 = vpop.f32.mrf.mxu0
        %v629 = vadd.f32 0.0, %v628
        %630 = vdwg.mxu0
        %631 = vmatpush.bf16.msra.mxu0 0
        %632 = vmatpush.bf16.msra.mxu0 0
        %633 = vmatpush.bf16.msra.mxu0 0
        %634 = vmatpush.bf16.msra.mxu0 %v615
        %635 = vmatpush.bf16.msra.mxu0 %v597
        %636 = vmatpush.bf16.msra.mxu0 %v595
        %637 = vmatpush.bf16.msra.mxu0 %v593
        %638 = vmatpush.bf16.msra.mxu0 %v591
        %639 = vmatmul.bf16.gmra.mxu0 %v609
        %v640 = vpop.f32.mrf.mxu0
        %v641 = vadd.f32 0.0, %v640
        %v642 = vpop.f32.mrf.mxu0
        %v643 = vadd.f32 0.0, %v642
        %644 = vdwg.mxu0
        %v645 = vadd.f32 %v532, %v627
        %v646 = vadd.f32 %v546, %v641
        %v647 = vadd.f32 %v534, %v629
        %v648 = vadd.f32 %v548, %v643
        %v649 = vld [vmem:[#allocation2 + $0x9] sm:$0xff]
        %v650 = vld [vmem:[#allocation2 + $0x11] sm:$0xff]
        %v651 = vpack.c.bf16 %v650, %v649
        %s652 = scalar_lea.vmem [#allocation9], 144
        %v653 = vld [vmem:[%s652] sm:$0xff]
        %v654 = vld [vmem:[%s652 + $0x8] sm:$0xff]
        %v655 = vld [vmem:[%s652 + $0x10] sm:$0xff]
        %v656 = vld [vmem:[%s652 + $0x18] sm:$0xff]
        %v657 = vld [vmem:[%s652 + $0x20] sm:$0xff]
        %v658 = vld [vmem:[%s652 + $0x28] sm:$0xff]
        %v659 = vld [vmem:[%s652 + $0x30] sm:$0xff]
        %v660 = vld [vmem:[%s652 + $0x38] sm:$0xff]
        %v661 = vld [vmem:[%s652 + $0x40] sm:$0xff]
        %v671 = vunpack.c.l.b16 %v653
        %v672 = vunpack.c.h.b16 %v653
        %v673 = vunpack.c.l.b16 %v654
        %v674 = vunpack.c.h.b16 %v654
        %v675 = vunpack.c.l.b16 %v655
        %v676 = vunpack.c.h.b16 %v655
        %v677 = vunpack.c.l.b16 %v656
        %v678 = vunpack.c.h.b16 %v656
        %v679 = vunpack.c.l.b16 %v657
        %v680 = vunpack.c.h.b16 %v657
        %v681 = vunpack.c.l.b16 %v658
        %v682 = vunpack.c.h.b16 %v658
        %v683 = vunpack.c.l.b16 %v659
        %v684 = vunpack.c.h.b16 %v659
        %v685 = vunpack.c.l.b16 %v660
        %v686 = vunpack.c.h.b16 %v660
        %v687 = vunpack.c.l.b16 %v661
        %v688 = vunpack.c.h.b16 %v661
        %v689 = vpack.c.b16 %v673, %v671
        %v690 = vpack.c.b16 %v674, %v672
        %v691 = vpack.c.b16 %v677, %v675
        %v692 = vpack.c.b16 %v678, %v676
        %v693 = vpack.c.b16 %v681, %v679
        %v694 = vpack.c.b16 %v682, %v680
        %v695 = vpack.c.b16 %v685, %v683
        %v696 = vpack.c.b16 %v686, %v684
        %v697 = vpack.c.b16 %v687, %v687
        %v698 = vpack.c.b16 %v688, %v688
        %v708 = vsel %vm436, %v651, 0
        %v711 = vsel %vm515, %v697, 0
        %v714 = vsel %vm515, %v698, 0
        %716 = vmatpush.bf16.msra.mxu0 0
        %717 = vmatpush.bf16.msra.mxu0 0
        %718 = vmatpush.bf16.msra.mxu0 0
        %719 = vmatpush.bf16.msra.mxu0 %v711
        %720 = vmatpush.bf16.msra.mxu0 %v695
        %721 = vmatpush.bf16.msra.mxu0 %v693
        %722 = vmatpush.bf16.msra.mxu0 %v691
        %723 = vmatpush.bf16.msra.mxu0 %v689
        %724 = vmatmul.bf16.gmra.mxu0 %v708
        %v725 = vpop.f32.mrf.mxu0
        %v726 = vadd.f32 0.0, %v725
        %v727 = vpop.f32.mrf.mxu0
        %v728 = vadd.f32 0.0, %v727
        %729 = vdwg.mxu0
        %730 = vmatpush.bf16.msra.mxu0 0
        %731 = vmatpush.bf16.msra.mxu0 0
        %732 = vmatpush.bf16.msra.mxu0 0
        %733 = vmatpush.bf16.msra.mxu0 %v714
        %734 = vmatpush.bf16.msra.mxu0 %v696
        %735 = vmatpush.bf16.msra.mxu0 %v694
        %736 = vmatpush.bf16.msra.mxu0 %v692
        %737 = vmatpush.bf16.msra.mxu0 %v690
        %738 = vmatmul.bf16.gmra.mxu0 %v708
        %v739 = vpop.f32.mrf.mxu0
        %v740 = vadd.f32 0.0, %v739
        %v741 = vpop.f32.mrf.mxu0
        %v742 = vadd.f32 0.0, %v741
        %743 = vdwg.mxu0
        %v744 = vadd.f32 %v645, %v726
        %v745 = vadd.f32 %v646, %v740
        %v746 = vadd.f32 %v647, %v728
        %v747 = vadd.f32 %v648, %v742
        %v748 = vmax.f32 %v744, 0.0
        %v749 = vmax.f32 %v745, 0.0
        %v750 = vmax.f32 %v746, 0.0
        %v751 = vmax.f32 %v747, 0.0
        %v752 = vmax.f32 %v748, %v749
        %v753 = vmax.f32 %v750, %v751
        %754 = vst [vmem:[#allocation5] sm:$0xff] %v752
        %755 = vst [vmem:[#allocation5 + $0x8] sm:$0xff] %v753
        %756 = vst [vmem:[#allocation3] sm:$0xff] 0.0
        %vm757 = vcmask 261120
        %758 = vst.msk [vmem:[#allocation3 + $0x8] sm:$0xff] %vm757, 0.0
        %759 = vst [vmem:[#allocation3 + $0x20] sm:$0xff] 0.0
        %760 = vst.msk [vmem:[#allocation3 + $0x28] sm:$0xff] %vm757, 0.0
        %761 = vst.msk [vmem:[#allocation3 + $0x8] sm:$0xff] %vm757, 0.0
        %762 = vst.msk [vmem:[#allocation3 + $0x18] sm:$0xff] %vm757, 0.0
        %763 = vst.msk [vmem:[#allocation3 + $0x28] sm:$0xff] %vm757, 0.0
        %v764 = vld [vmem:[#allocation5] ss:$2 sm:$0xff]
        %s765 = scalar_lea.vmem [#allocation5], 1
        %v766 = vld [vmem:[%s765] ss:$2 sm:$0xff]
        %v767 = vmax.f32 %v764, %v766
        %768 = vst [vmem:[#allocation3 + $0x10] sm:$0xff] %v767
        %v769 = vld [vmem:[#allocation3] sm:$0x80]
        %v770 = vld [vmem:[#allocation3 + $0x8] sm:$0x80]
        %v771 = vld [vmem:[#allocation3 + $0x10] sm:$0x7f]
        %v772 = vld [vmem:[#allocation3 + $0x18] sm:$0x7f]
        %v773 = vpack.c.bf16 %v771, %v769
        %v774 = vpack.c.bf16 %v772, %v770
        %v775 = vld [vmem:[#allocation12] sm:$0xff]
        %v776 = vld [vmem:[#allocation12 + $0x8] sm:$0xff]
        %v777 = vld [vmem:[#allocation12 + $0x10] sm:$0xff]
        %v778 = vld [vmem:[#allocation12 + $0x18] sm:$0xff]
        %v779 = vld [vmem:[#allocation12 + $0x20] sm:$0xff]
        %v780 = vld [vmem:[#allocation12 + $0x28] sm:$0xff]
        %v781 = vld [vmem:[#allocation12 + $0x30] sm:$0xff]
        %v782 = vld [vmem:[#allocation12 + $0x38] sm:$0xff]
        %v783 = vld [vmem:[#allocation12 + $0x40] sm:$0xff]
        %v784 = vld [vmem:[#allocation12 + $0x48] sm:$0xff]
        %v785 = vld [vmem:[#allocation12 + $0x50] sm:$0xff]
        %v786 = vld [vmem:[#allocation12 + $0x58] sm:$0xff]
        %v787 = vld [vmem:[#allocation12 + $0x60] sm:$0xff]
        %v788 = vld [vmem:[#allocation12 + $0x68] sm:$0xff]
        %v789 = vld [vmem:[#allocation12 + $0x70] sm:$0xff]
        %v790 = vld [vmem:[#allocation12 + $0x78] sm:$0xff]
        %v791 = vld [vmem:[#allocation12 + $0x80] sm:$0xff]
        %v792 = vld [vmem:[#allocation12 + $0x88] sm:$0xff]
        %v793 = vld [vmem:[#allocation12 + $0x90] sm:$0xff]
        %v794 = vld [vmem:[#allocation12 + $0x98] sm:$0xff]
        %v795 = vld [vmem:[%s4] sm:$0x3]
        %v797 = vperm.slane %v795, 0
        %v798 = vperm.slane %v795, 1
        %v802 = vshrl.u32 %v773, 16
        %v804 = vrot.slane %v802, 3
        %v805 = vshll.u32 %v773, 16
        %v807 = vrot.slane %v805, 4
        %v808 = vor.u32 %v804, %v807
        %v810 = vshrl.u32 %v774, 16
        %v812 = vrot.slane %v810, 3
        %v813 = vshll.u32 %v774, 16
        %v815 = vrot.slane %v813, 4
        %v816 = vor.u32 %v812, %v815
        %v838 = vunpack.c.l.b16 %v775
        %v839 = vunpack.c.h.b16 %v775
        %v840 = vunpack.c.l.b16 %v776
        %v841 = vunpack.c.h.b16 %v776
        %v842 = vunpack.c.l.b16 %v777
        %v843 = vunpack.c.h.b16 %v777
        %v844 = vunpack.c.l.b16 %v778
        %v845 = vunpack.c.h.b16 %v778
        %v846 = vunpack.c.l.b16 %v779
        %v847 = vunpack.c.h.b16 %v779
        %v848 = vunpack.c.l.b16 %v780
        %v849 = vunpack.c.h.b16 %v780
        %v850 = vunpack.c.l.b16 %v781
        %v851 = vunpack.c.h.b16 %v781
        %v852 = vunpack.c.l.b16 %v782
        %v853 = vunpack.c.h.b16 %v782
        %v854 = vunpack.c.l.b16 %v783
        %v855 = vunpack.c.h.b16 %v783
        %v856 = vunpack.c.l.b16 %v784
        %v857 = vunpack.c.h.b16 %v784
        %v858 = vunpack.c.l.b16 %v785
        %v859 = vunpack.c.h.b16 %v785
        %v860 = vunpack.c.l.b16 %v786
        %v861 = vunpack.c.h.b16 %v786
        %v862 = vunpack.c.l.b16 %v787
        %v863 = vunpack.c.h.b16 %v787
        %v864 = vunpack.c.l.b16 %v788
        %v865 = vunpack.c.h.b16 %v788
        %v866 = vunpack.c.l.b16 %v789
        %v867 = vunpack.c.h.b16 %v789
        %v868 = vunpack.c.l.b16 %v790
        %v869 = vunpack.c.h.b16 %v790
        %v870 = vunpack.c.l.b16 %v791
        %v871 = vunpack.c.h.b16 %v791
        %v872 = vunpack.c.l.b16 %v792
        %v873 = vunpack.c.h.b16 %v792
        %v874 = vunpack.c.l.b16 %v793
        %v875 = vunpack.c.h.b16 %v793
        %v876 = vunpack.c.l.b16 %v794
        %v877 = vunpack.c.h.b16 %v794
        %v878 = vpack.c.b16 %v840, %v838
        %v879 = vpack.c.b16 %v841, %v839
        %v880 = vpack.c.b16 %v844, %v842
        %v881 = vpack.c.b16 %v845, %v843
        %v882 = vpack.c.b16 %v848, %v846
        %v883 = vpack.c.b16 %v849, %v847
        %v884 = vpack.c.b16 %v852, %v850
        %v885 = vpack.c.b16 %v853, %v851
        %v886 = vpack.c.b16 %v856, %v854
        %v887 = vpack.c.b16 %v857, %v855
        %v888 = vpack.c.b16 %v860, %v858
        %v889 = vpack.c.b16 %v861, %v859
        %v890 = vpack.c.b16 %v864, %v862
        %v891 = vpack.c.b16 %v865, %v863
        %v892 = vpack.c.b16 %v868, %v866
        %v893 = vpack.c.b16 %v869, %v867
        %v894 = vpack.c.b16 %v872, %v870
        %v895 = vpack.c.b16 %v873, %v871
        %v896 = vpack.c.b16 %v876, %v874
        %v897 = vpack.c.b16 %v877, %v875
        %v919 = vsel %vm757, %v816, 0
        %921 = vmatpush.bf16.msra.mxu0 %v892
        %922 = vmatpush.bf16.msra.mxu0 %v890
        %923 = vmatpush.bf16.msra.mxu0 %v888
        %924 = vmatpush.bf16.msra.mxu0 %v886
        %925 = vmatpush.bf16.msra.mxu0 %v884
        %926 = vmatpush.bf16.msra.mxu0 %v882
        %927 = vmatpush.bf16.msra.mxu0 %v880
        %928 = vmatpush.bf16.msra.mxu0 %v878
        %929 = vmatmul.bf16.gmra.mxu0 %v808
        %v930 = vpop.f32.mrf.mxu0
        %v931 = vadd.f32 %v797, %v930
        %v932 = vpop.f32.mrf.mxu0
        %933 = vdwg.mxu0
        %934 = vmatpush.bf16.msra.mxu0 0
        %935 = vmatpush.bf16.msra.mxu0 0
        %936 = vmatpush.bf16.msra.mxu0 0
        %937 = vmatpush.bf16.msra.mxu0 0
        %938 = vmatpush.bf16.msra.mxu0 0
        %939 = vmatpush.bf16.msra.mxu0 0
        %940 = vmatpush.bf16.msra.mxu0 %v896
        %941 = vmatpush.bf16.msra.mxu0 %v894
        %942 = vmatmul.bf16.gmra.mxu0 %v919
        %v943 = vpop.f32.mrf.mxu0
        %v944 = vadd.f32 %v931, %v943
        %v945 = vpop.f32.mrf.mxu0
        %946 = vdwg.mxu0
        %947 = vmatpush.bf16.msra.mxu0 %v893
        %948 = vmatpush.bf16.msra.mxu0 %v891
        %949 = vmatpush.bf16.msra.mxu0 %v889
        %950 = vmatpush.bf16.msra.mxu0 %v887
        %951 = vmatpush.bf16.msra.mxu0 %v885
        %952 = vmatpush.bf16.msra.mxu0 %v883
        %953 = vmatpush.bf16.msra.mxu0 %v881
        %954 = vmatpush.bf16.msra.mxu0 %v879
        %955 = vmatmul.bf16.gmra.mxu0 %v808
        %v956 = vpop.f32.mrf.mxu0
        %v957 = vadd.f32 %v798, %v956
        %v958 = vpop.f32.mrf.mxu0
        %959 = vdwg.mxu0
        %960 = vmatpush.bf16.msra.mxu0 0
        %961 = vmatpush.bf16.msra.mxu0 0
        %962 = vmatpush.bf16.msra.mxu0 0
        %963 = vmatpush.bf16.msra.mxu0 0
        %964 = vmatpush.bf16.msra.mxu0 0
        %965 = vmatpush.bf16.msra.mxu0 0
        %966 = vmatpush.bf16.msra.mxu0 %v897
        %967 = vmatpush.bf16.msra.mxu0 %v895
        %968 = vmatmul.bf16.gmra.mxu0 %v919
        %v969 = vpop.f32.mrf.mxu0
        %v970 = vadd.f32 %v957, %v969
        %v971 = vpop.f32.mrf.mxu0
        %972 = vdwg.mxu0
        %v973 = vld [vmem:[#allocation3 + $0x10] sm:$0xff]
        %v974 = vld [vmem:[#allocation3 + $0x18] sm:$0xff]
        %v975 = vpack.c.bf16 %v973, %v973
        %v976 = vpack.c.bf16 %v974, %v974
        %s977 = scalar_lea.vmem [#allocation12], 160
        %v978 = vld [vmem:[%s977] sm:$0xff]
        %v979 = vld [vmem:[%s977 + $0x8] sm:$0xff]
        %v980 = vld [vmem:[%s977 + $0x10] sm:$0xff]
        %v981 = vld [vmem:[%s977 + $0x18] sm:$0xff]
        %v982 = vld [vmem:[%s977 + $0x20] sm:$0xff]
        %v983 = vld [vmem:[%s977 + $0x28] sm:$0xff]
        %v984 = vld [vmem:[%s977 + $0x30] sm:$0xff]
        %v985 = vld [vmem:[%s977 + $0x38] sm:$0xff]
        %v986 = vld [vmem:[%s977 + $0x40] sm:$0xff]
        %v987 = vld [vmem:[%s977 + $0x48] sm:$0xff]
        %v988 = vld [vmem:[%s977 + $0x50] sm:$0xff]
        %v989 = vld [vmem:[%s977 + $0x58] sm:$0xff]
        %v990 = vld [vmem:[%s977 + $0x60] sm:$0xff]
        %v991 = vld [vmem:[%s977 + $0x68] sm:$0xff]
        %v992 = vld [vmem:[%s977 + $0x70] sm:$0xff]
        %v993 = vld [vmem:[%s977 + $0x78] sm:$0xff]
        %v994 = vld [vmem:[%s977 + $0x80] sm:$0xff]
        %v995 = vld [vmem:[%s977 + $0x88] sm:$0xff]
        %v996 = vld [vmem:[%s977 + $0x90] sm:$0xff]
        %v997 = vld [vmem:[%s977 + $0x98] sm:$0xff]
        %v1018 = vunpack.c.l.b16 %v978
        %v1019 = vunpack.c.h.b16 %v978
        %v1020 = vunpack.c.l.b16 %v979
        %v1021 = vunpack.c.h.b16 %v979
        %v1022 = vunpack.c.l.b16 %v980
        %v1023 = vunpack.c.h.b16 %v980
        %v1024 = vunpack.c.l.b16 %v981
        %v1025 = vunpack.c.h.b16 %v981
        %v1026 = vunpack.c.l.b16 %v982
        %v1027 = vunpack.c.h.b16 %v982
        %v1028 = vunpack.c.l.b16 %v983
        %v1029 = vunpack.c.h.b16 %v983
        %v1030 = vunpack.c.l.b16 %v984
        %v1031 = vunpack.c.h.b16 %v984
        %v1032 = vunpack.c.l.b16 %v985
        %v1033 = vunpack.c.h.b16 %v985
        %v1034 = vunpack.c.l.b16 %v986
        %v1035 = vunpack.c.h.b16 %v986
        %v1036 = vunpack.c.l.b16 %v987
        %v1037 = vunpack.c.h.b16 %v987
        %v1038 = vunpack.c.l.b16 %v988
        %v1039 = vunpack.c.h.b16 %v988
        %v1040 = vunpack.c.l.b16 %v989
        %v1041 = vunpack.c.h.b16 %v989
        %v1042 = vunpack.c.l.b16 %v990
        %v1043 = vunpack.c.h.b16 %v990
        %v1044 = vunpack.c.l.b16 %v991
        %v1045 = vunpack.c.h.b16 %v991
        %v1046 = vunpack.c.l.b16 %v992
        %v1047 = vunpack.c.h.b16 %v992
        %v1048 = vunpack.c.l.b16 %v993
        %v1049 = vunpack.c.h.b16 %v993
        %v1050 = vunpack.c.l.b16 %v994
        %v1051 = vunpack.c.h.b16 %v994
        %v1052 = vunpack.c.l.b16 %v995
        %v1053 = vunpack.c.h.b16 %v995
        %v1054 = vunpack.c.l.b16 %v996
        %v1055 = vunpack.c.h.b16 %v996
        %v1056 = vunpack.c.l.b16 %v997
        %v1057 = vunpack.c.h.b16 %v997
        %v1058 = vpack.c.b16 %v1020, %v1018
        %v1059 = vpack.c.b16 %v1021, %v1019
        %v1060 = vpack.c.b16 %v1024, %v1022
        %v1061 = vpack.c.b16 %v1025, %v1023
        %v1062 = vpack.c.b16 %v1028, %v1026
        %v1063 = vpack.c.b16 %v1029, %v1027
        %v1064 = vpack.c.b16 %v1032, %v1030
        %v1065 = vpack.c.b16 %v1033, %v1031
        %v1066 = vpack.c.b16 %v1036, %v1034
        %v1067 = vpack.c.b16 %v1037, %v1035
        %v1068 = vpack.c.b16 %v1040, %v1038
        %v1069 = vpack.c.b16 %v1041, %v1039
        %v1070 = vpack.c.b16 %v1044, %v1042
        %v1071 = vpack.c.b16 %v1045, %v1043
        %v1072 = vpack.c.b16 %v1048, %v1046
        %v1073 = vpack.c.b16 %v1049, %v1047
        %v1074 = vpack.c.b16 %v1052, %v1050
        %v1075 = vpack.c.b16 %v1053, %v1051
        %v1076 = vpack.c.b16 %v1056, %v1054
        %v1077 = vpack.c.b16 %v1057, %v1055
        %v1099 = vsel %vm757, %v976, 0
        %1101 = vmatpush.bf16.msra.mxu0 %v1072
        %1102 = vmatpush.bf16.msra.mxu0 %v1070
        %1103 = vmatpush.bf16.msra.mxu0 %v1068
        %1104 = vmatpush.bf16.msra.mxu0 %v1066
        %1105 = vmatpush.bf16.msra.mxu0 %v1064
        %1106 = vmatpush.bf16.msra.mxu0 %v1062
        %1107 = vmatpush.bf16.msra.mxu0 %v1060
        %1108 = vmatpush.bf16.msra.mxu0 %v1058
        %1109 = vmatmul.bf16.gmra.mxu0 %v975
        %v1110 = vpop.f32.mrf.mxu0
        %v1111 = vadd.f32 0.0, %v1110
        %v1112 = vpop.f32.mrf.mxu0
        %1113 = vdwg.mxu0
        %1114 = vmatpush.bf16.msra.mxu0 0
        %1115 = vmatpush.bf16.msra.mxu0 0
        %1116 = vmatpush.bf16.msra.mxu0 0
        %1117 = vmatpush.bf16.msra.mxu0 0
        %1118 = vmatpush.bf16.msra.mxu0 0
        %1119 = vmatpush.bf16.msra.mxu0 0
        %1120 = vmatpush.bf16.msra.mxu0 %v1076
        %1121 = vmatpush.bf16.msra.mxu0 %v1074
        %1122 = vmatmul.bf16.gmra.mxu0 %v1099
        %v1123 = vpop.f32.mrf.mxu0
        %v1124 = vadd.f32 %v1111, %v1123
        %v1125 = vpop.f32.mrf.mxu0
        %1126 = vdwg.mxu0
        %1127 = vmatpush.bf16.msra.mxu0 %v1073
        %1128 = vmatpush.bf16.msra.mxu0 %v1071
        %1129 = vmatpush.bf16.msra.mxu0 %v1069
        %1130 = vmatpush.bf16.msra.mxu0 %v1067
        %1131 = vmatpush.bf16.msra.mxu0 %v1065
        %1132 = vmatpush.bf16.msra.mxu0 %v1063
        %1133 = vmatpush.bf16.msra.mxu0 %v1061
        %1134 = vmatpush.bf16.msra.mxu0 %v1059
        %1135 = vmatmul.bf16.gmra.mxu0 %v975
        %v1136 = vpop.f32.mrf.mxu0
        %v1137 = vadd.f32 0.0, %v1136
        %v1138 = vpop.f32.mrf.mxu0
        %1139 = vdwg.mxu0
        %1140 = vmatpush.bf16.msra.mxu0 0
        %1141 = vmatpush.bf16.msra.mxu0 0
        %1142 = vmatpush.bf16.msra.mxu0 0
        %1143 = vmatpush.bf16.msra.mxu0 0
        %1144 = vmatpush.bf16.msra.mxu0 0
        %1145 = vmatpush.bf16.msra.mxu0 0
        %1146 = vmatpush.bf16.msra.mxu0 %v1077
        %1147 = vmatpush.bf16.msra.mxu0 %v1075
        %1148 = vmatmul.bf16.gmra.mxu0 %v1099
        %v1149 = vpop.f32.mrf.mxu0
        %v1150 = vadd.f32 %v1137, %v1149
        %v1151 = vpop.f32.mrf.mxu0
        %1152 = vdwg.mxu0
        %v1153 = vadd.f32 %v944, %v1124
        %v1154 = vadd.f32 %v970, %v1150
        %v1155 = vld [vmem:[#allocation3 + $0x10] sm:$0xfe]
        %v1156 = vld [vmem:[#allocation3 + $0x18] sm:$0xfe]
        %v1157 = vld [vmem:[#allocation3 + $0x20] sm:$0x1]
        %v1158 = vld [vmem:[#allocation3 + $0x28] sm:$0x1]
        %v1159 = vpack.c.bf16 %v1157, %v1155
        %v1160 = vpack.c.bf16 %v1158, %v1156
        %s1161 = scalar_lea.vmem [#allocation12], 320
        %v1162 = vld [vmem:[%s1161] sm:$0xff]
        %v1163 = vld [vmem:[%s1161 + $0x8] sm:$0xff]
        %v1164 = vld [vmem:[%s1161 + $0x10] sm:$0xff]
        %v1165 = vld [vmem:[%s1161 + $0x18] sm:$0xff]
        %v1166 = vld [vmem:[%s1161 + $0x20] sm:$0xff]
        %v1167 = vld [vmem:[%s1161 + $0x28] sm:$0xff]
        %v1168 = vld [vmem:[%s1161 + $0x30] sm:$0xff]
        %v1169 = vld [vmem:[%s1161 + $0x38] sm:$0xff]
        %v1170 = vld [vmem:[%s1161 + $0x40] sm:$0xff]
        %v1171 = vld [vmem:[%s1161 + $0x48] sm:$0xff]
        %v1172 = vld [vmem:[%s1161 + $0x50] sm:$0xff]
        %v1173 = vld [vmem:[%s1161 + $0x58] sm:$0xff]
        %v1174 = vld [vmem:[%s1161 + $0x60] sm:$0xff]
        %v1175 = vld [vmem:[%s1161 + $0x68] sm:$0xff]
        %v1176 = vld [vmem:[%s1161 + $0x70] sm:$0xff]
        %v1177 = vld [vmem:[%s1161 + $0x78] sm:$0xff]
        %v1178 = vld [vmem:[%s1161 + $0x80] sm:$0xff]
        %v1179 = vld [vmem:[%s1161 + $0x88] sm:$0xff]
        %v1180 = vld [vmem:[%s1161 + $0x90] sm:$0xff]
        %v1181 = vld [vmem:[%s1161 + $0x98] sm:$0xff]
        %v1183 = vshrl.u32 %v1159, 16
        %v1185 = vshll.u32 %v1159, 16
        %v1187 = vrot.slane %v1185, 1
        %v1188 = vor.u32 %v1183, %v1187
        %v1190 = vshrl.u32 %v1160, 16
        %v1192 = vshll.u32 %v1160, 16
        %v1194 = vrot.slane %v1192, 1
        %v1195 = vor.u32 %v1190, %v1194
        %v1217 = vunpack.c.l.b16 %v1162
        %v1218 = vunpack.c.h.b16 %v1162
        %v1219 = vunpack.c.l.b16 %v1163
        %v1220 = vunpack.c.h.b16 %v1163
        %v1221 = vunpack.c.l.b16 %v1164
        %v1222 = vunpack.c.h.b16 %v1164
        %v1223 = vunpack.c.l.b16 %v1165
        %v1224 = vunpack.c.h.b16 %v1165
        %v1225 = vunpack.c.l.b16 %v1166
        %v1226 = vunpack.c.h.b16 %v1166
        %v1227 = vunpack.c.l.b16 %v1167
        %v1228 = vunpack.c.h.b16 %v1167
        %v1229 = vunpack.c.l.b16 %v1168
        %v1230 = vunpack.c.h.b16 %v1168
        %v1231 = vunpack.c.l.b16 %v1169
        %v1232 = vunpack.c.h.b16 %v1169
        %v1233 = vunpack.c.l.b16 %v1170
        %v1234 = vunpack.c.h.b16 %v1170
        %v1235 = vunpack.c.l.b16 %v1171
        %v1236 = vunpack.c.h.b16 %v1171
        %v1237 = vunpack.c.l.b16 %v1172
        %v1238 = vunpack.c.h.b16 %v1172
        %v1239 = vunpack.c.l.b16 %v1173
        %v1240 = vunpack.c.h.b16 %v1173
        %v1241 = vunpack.c.l.b16 %v1174
        %v1242 = vunpack.c.h.b16 %v1174
        %v1243 = vunpack.c.l.b16 %v1175
        %v1244 = vunpack.c.h.b16 %v1175
        %v1245 = vunpack.c.l.b16 %v1176
        %v1246 = vunpack.c.h.b16 %v1176
        %v1247 = vunpack.c.l.b16 %v1177
        %v1248 = vunpack.c.h.b16 %v1177
        %v1249 = vunpack.c.l.b16 %v1178
        %v1250 = vunpack.c.h.b16 %v1178
        %v1251 = vunpack.c.l.b16 %v1179
        %v1252 = vunpack.c.h.b16 %v1179
        %v1253 = vunpack.c.l.b16 %v1180
        %v1254 = vunpack.c.h.b16 %v1180
        %v1255 = vunpack.c.l.b16 %v1181
        %v1256 = vunpack.c.h.b16 %v1181
        %v1257 = vpack.c.b16 %v1219, %v1217
        %v1258 = vpack.c.b16 %v1220, %v1218
        %v1259 = vpack.c.b16 %v1223, %v1221
        %v1260 = vpack.c.b16 %v1224, %v1222
        %v1261 = vpack.c.b16 %v1227, %v1225
        %v1262 = vpack.c.b16 %v1228, %v1226
        %v1263 = vpack.c.b16 %v1231, %v1229
        %v1264 = vpack.c.b16 %v1232, %v1230
        %v1265 = vpack.c.b16 %v1235, %v1233
        %v1266 = vpack.c.b16 %v1236, %v1234
        %v1267 = vpack.c.b16 %v1239, %v1237
        %v1268 = vpack.c.b16 %v1240, %v1238
        %v1269 = vpack.c.b16 %v1243, %v1241
        %v1270 = vpack.c.b16 %v1244, %v1242
        %v1271 = vpack.c.b16 %v1247, %v1245
        %v1272 = vpack.c.b16 %v1248, %v1246
        %v1273 = vpack.c.b16 %v1251, %v1249
        %v1274 = vpack.c.b16 %v1252, %v1250
        %v1275 = vpack.c.b16 %v1255, %v1253
        %v1276 = vpack.c.b16 %v1256, %v1254
        %v1298 = vsel %vm757, %v1195, 0
        %1300 = vmatpush.bf16.msra.mxu0 %v1271
        %1301 = vmatpush.bf16.msra.mxu0 %v1269
        %1302 = vmatpush.bf16.msra.mxu0 %v1267
        %1303 = vmatpush.bf16.msra.mxu0 %v1265
        %1304 = vmatpush.bf16.msra.mxu0 %v1263
        %1305 = vmatpush.bf16.msra.mxu0 %v1261
        %1306 = vmatpush.bf16.msra.mxu0 %v1259
        %1307 = vmatpush.bf16.msra.mxu0 %v1257
        %1308 = vmatmul.bf16.gmra.mxu0 %v1188
        %v1309 = vpop.f32.mrf.mxu0
        %v1310 = vadd.f32 0.0, %v1309
        %v1311 = vpop.f32.mrf.mxu0
        %1312 = vdwg.mxu0
        %1313 = vmatpush.bf16.msra.mxu0 0
        %1314 = vmatpush.bf16.msra.mxu0 0
        %1315 = vmatpush.bf16.msra.mxu0 0
        %1316 = vmatpush.bf16.msra.mxu0 0
        %1317 = vmatpush.bf16.msra.mxu0 0
        %1318 = vmatpush.bf16.msra.mxu0 0
        %1319 = vmatpush.bf16.msra.mxu0 %v1275
        %1320 = vmatpush.bf16.msra.mxu0 %v1273
        %1321 = vmatmul.bf16.gmra.mxu0 %v1298
        %v1322 = vpop.f32.mrf.mxu0
        %v1323 = vadd.f32 %v1310, %v1322
        %v1324 = vpop.f32.mrf.mxu0
        %1325 = vdwg.mxu0
        %1326 = vmatpush.bf16.msra.mxu0 %v1272
        %1327 = vmatpush.bf16.msra.mxu0 %v1270
        %1328 = vmatpush.bf16.msra.mxu0 %v1268
        %1329 = vmatpush.bf16.msra.mxu0 %v1266
        %1330 = vmatpush.bf16.msra.mxu0 %v1264
        %1331 = vmatpush.bf16.msra.mxu0 %v1262
        %1332 = vmatpush.bf16.msra.mxu0 %v1260
        %1333 = vmatpush.bf16.msra.mxu0 %v1258
        %1334 = vmatmul.bf16.gmra.mxu0 %v1188
        %v1335 = vpop.f32.mrf.mxu0
        %v1336 = vadd.f32 0.0, %v1335
        %v1337 = vpop.f32.mrf.mxu0
        %1338 = vdwg.mxu0
        %1339 = vmatpush.bf16.msra.mxu0 0
        %1340 = vmatpush.bf16.msra.mxu0 0
        %1341 = vmatpush.bf16.msra.mxu0 0
        %1342 = vmatpush.bf16.msra.mxu0 0
        %1343 = vmatpush.bf16.msra.mxu0 0
        %1344 = vmatpush.bf16.msra.mxu0 0
        %1345 = vmatpush.bf16.msra.mxu0 %v1276
        %1346 = vmatpush.bf16.msra.mxu0 %v1274
        %1347 = vmatmul.bf16.gmra.mxu0 %v1298
        %v1348 = vpop.f32.mrf.mxu0
        %v1349 = vadd.f32 %v1336, %v1348
        %v1350 = vpop.f32.mrf.mxu0
        %1351 = vdwg.mxu0
        %v1352 = vadd.f32 %v1153, %v1323
        %v1353 = vadd.f32 %v1154, %v1349
        %v1354 = vmax.f32 %v1352, 0.0
        %v1355 = vmax.f32 %v1353, 0.0
        %v1356 = vmax.f32 %v1354, %v1355
        %1357 = vst [vmem:[#allocation5] sm:$0xff] %v1356
        %1358 = vst [vmem:[#allocation4] sm:$0xff] 0.0
        %1359 = vst.msk [vmem:[#allocation4 + $0x8] sm:$0xff] %vm446, 0.0
        %1360 = vst [vmem:[#allocation4 + $0x10] sm:$0xf0] 0.0
        %vm1361 = vcmask 523268
        %1362 = vst.msk [vmem:[#allocation4 + $0x18] sm:$0xf0] %vm1361, 0.0
        %1363 = vst.msk [vmem:[#allocation4 + $0x8] sm:$0xff] %vm446, 0.0
        %1364 = vst.msk [vmem:[#allocation4 + $0x18] sm:$0xff] %vm446, 0.0
        %v1365 = vld [vmem:[#allocation5] ss:$2 sm:$0xf]
        %v1366 = vld [vmem:[%s765] ss:$2 sm:$0xf]
        %v1367 = vmax.f32 %v1365, %v1366
        %1368 = vst [vmem:[#allocation4 + $0x10] sm:$0xf] %v1367
        %v1369 = vld [vmem:[#allocation4] sm:$0x80]
        %v1370 = vld [vmem:[#allocation4 + $0x8] sm:$0x80]
        %v1371 = vld [vmem:[#allocation4 + $0x10] sm:$0x7]
        %v1372 = vld [vmem:[#allocation4 + $0x18] sm:$0x7]
        %v1373 = vpack.c.bf16 %v1371, %v1369
        %v1374 = vpack.c.bf16 %v1372, %v1370
        %v1375 = vld [vmem:[#allocation14] sm:$0xff]
        %v1376 = vld [vmem:[#allocation14 + $0x8] sm:$0xff]
        %v1377 = vld [vmem:[#allocation14 + $0x10] sm:$0xff]
        %v1378 = vld [vmem:[#allocation14 + $0x18] sm:$0xff]
        %v1379 = vld [vmem:[#allocation14 + $0x20] sm:$0xff]
        %v1380 = vld [vmem:[#allocation14 + $0x28] sm:$0xff]
        %v1381 = vld [vmem:[#allocation14 + $0x30] sm:$0xff]
        %v1382 = vld [vmem:[#allocation14 + $0x38] sm:$0xff]
        %v1383 = vld [vmem:[#allocation14 + $0x40] sm:$0xff]
        %v1384 = vld [vmem:[#allocation14 + $0x48] sm:$0xff]
        %v1385 = vld [vmem:[#allocation14 + $0x50] sm:$0xff]
        %v1386 = vld [vmem:[#allocation14 + $0x58] sm:$0xff]
        %v1387 = vld [vmem:[#allocation14 + $0x60] sm:$0xff]
        %v1388 = vld [vmem:[#allocation14 + $0x68] sm:$0xff]
        %v1389 = vld [vmem:[#allocation14 + $0x70] sm:$0xff]
        %v1390 = vld [vmem:[#allocation14 + $0x78] sm:$0xff]
        %v1391 = vld [vmem:[#allocation14 + $0x80] sm:$0xff]
        %v1392 = vld [vmem:[#allocation14 + $0x88] sm:$0xff]
        %v1393 = vld [vmem:[#allocation14 + $0x90] sm:$0xff]
        %v1394 = vld [vmem:[#allocation14 + $0x98] sm:$0xff]
        %v1395 = vld [vmem:[#allocation14 + $0xa0] sm:$0xff]
        %v1396 = vld [vmem:[#allocation14 + $0xa8] sm:$0xff]
        %v1397 = vld [vmem:[#allocation14 + $0xb0] sm:$0xff]
        %v1398 = vld [vmem:[#allocation14 + $0xb8] sm:$0xff]
        %v1399 = vld [vmem:[%s6] sm:$0x3]
        %v1401 = vperm.slane %v1399, 0
        %v1402 = vperm.slane %v1399, 1
        %v1406 = vshrl.u32 %v1373, 16
        %v1408 = vrot.slane %v1406, 3
        %v1409 = vshll.u32 %v1373, 16
        %v1411 = vrot.slane %v1409, 4
        %v1412 = vor.u32 %v1408, %v1411
        %v1414 = vshrl.u32 %v1374, 16
        %v1416 = vrot.slane %v1414, 3
        %v1417 = vshll.u32 %v1374, 16
        %v1419 = vrot.slane %v1417, 4
        %v1420 = vor.u32 %v1416, %v1419
        %v1446 = vunpack.c.l.b16 %v1375
        %v1447 = vunpack.c.h.b16 %v1375
        %v1448 = vunpack.c.l.b16 %v1376
        %v1449 = vunpack.c.h.b16 %v1376
        %v1450 = vunpack.c.l.b16 %v1377
        %v1451 = vunpack.c.h.b16 %v1377
        %v1452 = vunpack.c.l.b16 %v1378
        %v1453 = vunpack.c.h.b16 %v1378
        %v1454 = vunpack.c.l.b16 %v1379
        %v1455 = vunpack.c.h.b16 %v1379
        %v1456 = vunpack.c.l.b16 %v1380
        %v1457 = vunpack.c.h.b16 %v1380
        %v1458 = vunpack.c.l.b16 %v1381
        %v1459 = vunpack.c.h.b16 %v1381
        %v1460 = vunpack.c.l.b16 %v1382
        %v1461 = vunpack.c.h.b16 %v1382
        %v1462 = vunpack.c.l.b16 %v1383
        %v1463 = vunpack.c.h.b16 %v1383
        %v1464 = vunpack.c.l.b16 %v1384
        %v1465 = vunpack.c.h.b16 %v1384
        %v1466 = vunpack.c.l.b16 %v1385
        %v1467 = vunpack.c.h.b16 %v1385
        %v1468 = vunpack.c.l.b16 %v1386
        %v1469 = vunpack.c.h.b16 %v1386
        %v1470 = vunpack.c.l.b16 %v1387
        %v1471 = vunpack.c.h.b16 %v1387
        %v1472 = vunpack.c.l.b16 %v1388
        %v1473 = vunpack.c.h.b16 %v1388
        %v1474 = vunpack.c.l.b16 %v1389
        %v1475 = vunpack.c.h.b16 %v1389
        %v1476 = vunpack.c.l.b16 %v1390
        %v1477 = vunpack.c.h.b16 %v1390
        %v1478 = vunpack.c.l.b16 %v1391
        %v1479 = vunpack.c.h.b16 %v1391
        %v1480 = vunpack.c.l.b16 %v1392
        %v1481 = vunpack.c.h.b16 %v1392
        %v1482 = vunpack.c.l.b16 %v1393
        %v1483 = vunpack.c.h.b16 %v1393
        %v1484 = vunpack.c.l.b16 %v1394
        %v1485 = vunpack.c.h.b16 %v1394
        %v1486 = vunpack.c.l.b16 %v1395
        %v1487 = vunpack.c.h.b16 %v1395
        %v1488 = vunpack.c.l.b16 %v1396
        %v1489 = vunpack.c.h.b16 %v1396
        %v1490 = vunpack.c.l.b16 %v1397
        %v1491 = vunpack.c.h.b16 %v1397
        %v1492 = vunpack.c.l.b16 %v1398
        %v1493 = vunpack.c.h.b16 %v1398
        %v1494 = vpack.c.b16 %v1448, %v1446
        %v1495 = vpack.c.b16 %v1449, %v1447
        %v1496 = vpack.c.b16 %v1452, %v1450
        %v1497 = vpack.c.b16 %v1453, %v1451
        %v1498 = vpack.c.b16 %v1456, %v1454
        %v1499 = vpack.c.b16 %v1457, %v1455
        %v1500 = vpack.c.b16 %v1460, %v1458
        %v1501 = vpack.c.b16 %v1461, %v1459
        %v1502 = vpack.c.b16 %v1464, %v1462
        %v1503 = vpack.c.b16 %v1465, %v1463
        %v1504 = vpack.c.b16 %v1468, %v1466
        %v1505 = vpack.c.b16 %v1469, %v1467
        %v1506 = vpack.c.b16 %v1472, %v1470
        %v1507 = vpack.c.b16 %v1473, %v1471
        %v1508 = vpack.c.b16 %v1476, %v1474
        %v1509 = vpack.c.b16 %v1477, %v1475
        %v1510 = vpack.c.b16 %v1480, %v1478
        %v1511 = vpack.c.b16 %v1481, %v1479
        %v1512 = vpack.c.b16 %v1484, %v1482
        %v1513 = vpack.c.b16 %v1485, %v1483
        %v1514 = vpack.c.b16 %v1488, %v1486
        %v1515 = vpack.c.b16 %v1489, %v1487
        %v1516 = vpack.c.b16 %v1492, %v1490
        %v1517 = vpack.c.b16 %v1493, %v1491
        %v1543 = vsel %vm446, %v1420, 0
        %1545 = vmatpush.bf16.msra.mxu0 %v1508
        %1546 = vmatpush.bf16.msra.mxu0 %v1506
        %1547 = vmatpush.bf16.msra.mxu0 %v1504
        %1548 = vmatpush.bf16.msra.mxu0 %v1502
        %1549 = vmatpush.bf16.msra.mxu0 %v1500
        %1550 = vmatpush.bf16.msra.mxu0 %v1498
        %1551 = vmatpush.bf16.msra.mxu0 %v1496
        %1552 = vmatpush.bf16.msra.mxu0 %v1494
        %1553 = vmatmul.bf16.gmra.mxu0 %v1412
        %v1554 = vpop.f32.mrf.mxu0
        %v1555 = vadd.f32 %v1401, %v1554
        %v1556 = vpop.f32.mrf.mxu0
        %1557 = vdwg.mxu0
        %1558 = vmatpush.bf16.msra.mxu0 0
        %1559 = vmatpush.bf16.msra.mxu0 0
        %1560 = vmatpush.bf16.msra.mxu0 0
        %1561 = vmatpush.bf16.msra.mxu0 0
        %1562 = vmatpush.bf16.msra.mxu0 %v1516
        %1563 = vmatpush.bf16.msra.mxu0 %v1514
        %1564 = vmatpush.bf16.msra.mxu0 %v1512
        %1565 = vmatpush.bf16.msra.mxu0 %v1510
        %1566 = vmatmul.bf16.gmra.mxu0 %v1543
        %v1567 = vpop.f32.mrf.mxu0
        %v1568 = vadd.f32 %v1555, %v1567
        %v1569 = vpop.f32.mrf.mxu0
        %1570 = vdwg.mxu0
        %1571 = vmatpush.bf16.msra.mxu0 %v1509
        %1572 = vmatpush.bf16.msra.mxu0 %v1507
        %1573 = vmatpush.bf16.msra.mxu0 %v1505
        %1574 = vmatpush.bf16.msra.mxu0 %v1503
        %1575 = vmatpush.bf16.msra.mxu0 %v1501
        %1576 = vmatpush.bf16.msra.mxu0 %v1499
        %1577 = vmatpush.bf16.msra.mxu0 %v1497
        %1578 = vmatpush.bf16.msra.mxu0 %v1495
        %1579 = vmatmul.bf16.gmra.mxu0 %v1412
        %v1580 = vpop.f32.mrf.mxu0
        %v1581 = vadd.f32 %v1402, %v1580
        %v1582 = vpop.f32.mrf.mxu0
        %1583 = vdwg.mxu0
        %1584 = vmatpush.bf16.msra.mxu0 0
        %1585 = vmatpush.bf16.msra.mxu0 0
        %1586 = vmatpush.bf16.msra.mxu0 0
        %1587 = vmatpush.bf16.msra.mxu0 0
        %1588 = vmatpush.bf16.msra.mxu0 %v1517
        %1589 = vmatpush.bf16.msra.mxu0 %v1515
        %1590 = vmatpush.bf16.msra.mxu0 %v1513
        %1591 = vmatpush.bf16.msra.mxu0 %v1511
        %1592 = vmatmul.bf16.gmra.mxu0 %v1543
        %v1593 = vpop.f32.mrf.mxu0
        %v1594 = vadd.f32 %v1581, %v1593
        %v1595 = vpop.f32.mrf.mxu0
        %1596 = vdwg.mxu0
        %v1597 = vld [vmem:[#allocation4 + $0x10] sm:$0xf]
        %v1598 = vld [vmem:[#allocation4 + $0x18] sm:$0xf]
        %v1599 = vpack.c.bf16 %v1597, %v1597
        %v1600 = vpack.c.bf16 %v1598, %v1598
        %s1601 = scalar_lea.vmem [#allocation14], 192
        %v1602 = vld [vmem:[%s1601] sm:$0xff]
        %v1603 = vld [vmem:[%s1601 + $0x8] sm:$0xff]
        %v1604 = vld [vmem:[%s1601 + $0x10] sm:$0xff]
        %v1605 = vld [vmem:[%s1601 + $0x18] sm:$0xff]
        %v1606 = vld [vmem:[%s1601 + $0x20] sm:$0xff]
        %v1607 = vld [vmem:[%s1601 + $0x28] sm:$0xff]
        %v1608 = vld [vmem:[%s1601 + $0x30] sm:$0xff]
        %v1609 = vld [vmem:[%s1601 + $0x38] sm:$0xff]
        %v1610 = vld [vmem:[%s1601 + $0x40] sm:$0xff]
        %v1611 = vld [vmem:[%s1601 + $0x48] sm:$0xff]
        %v1612 = vld [vmem:[%s1601 + $0x50] sm:$0xff]
        %v1613 = vld [vmem:[%s1601 + $0x58] sm:$0xff]
        %v1614 = vld [vmem:[%s1601 + $0x60] sm:$0xff]
        %v1615 = vld [vmem:[%s1601 + $0x68] sm:$0xff]
        %v1616 = vld [vmem:[%s1601 + $0x70] sm:$0xff]
        %v1617 = vld [vmem:[%s1601 + $0x78] sm:$0xff]
        %v1618 = vld [vmem:[%s1601 + $0x80] sm:$0xff]
        %v1619 = vld [vmem:[%s1601 + $0x88] sm:$0xff]
        %v1620 = vld [vmem:[%s1601 + $0x90] sm:$0xff]
        %v1621 = vld [vmem:[%s1601 + $0x98] sm:$0xff]
        %v1622 = vld [vmem:[%s1601 + $0xa0] sm:$0xff]
        %v1623 = vld [vmem:[%s1601 + $0xa8] sm:$0xff]
        %v1624 = vld [vmem:[%s1601 + $0xb0] sm:$0xff]
        %v1625 = vld [vmem:[%s1601 + $0xb8] sm:$0xff]
        %v1650 = vunpack.c.l.b16 %v1602
        %v1651 = vunpack.c.h.b16 %v1602
        %v1652 = vunpack.c.l.b16 %v1603
        %v1653 = vunpack.c.h.b16 %v1603
        %v1654 = vunpack.c.l.b16 %v1604
        %v1655 = vunpack.c.h.b16 %v1604
        %v1656 = vunpack.c.l.b16 %v1605
        %v1657 = vunpack.c.h.b16 %v1605
        %v1658 = vunpack.c.l.b16 %v1606
        %v1659 = vunpack.c.h.b16 %v1606
        %v1660 = vunpack.c.l.b16 %v1607
        %v1661 = vunpack.c.h.b16 %v1607
        %v1662 = vunpack.c.l.b16 %v1608
        %v1663 = vunpack.c.h.b16 %v1608
        %v1664 = vunpack.c.l.b16 %v1609
        %v1665 = vunpack.c.h.b16 %v1609
        %v1666 = vunpack.c.l.b16 %v1610
        %v1667 = vunpack.c.h.b16 %v1610
        %v1668 = vunpack.c.l.b16 %v1611
        %v1669 = vunpack.c.h.b16 %v1611
        %v1670 = vunpack.c.l.b16 %v1612
        %v1671 = vunpack.c.h.b16 %v1612
        %v1672 = vunpack.c.l.b16 %v1613
        %v1673 = vunpack.c.h.b16 %v1613
        %v1674 = vunpack.c.l.b16 %v1614
        %v1675 = vunpack.c.h.b16 %v1614
        %v1676 = vunpack.c.l.b16 %v1615
        %v1677 = vunpack.c.h.b16 %v1615
        %v1678 = vunpack.c.l.b16 %v1616
        %v1679 = vunpack.c.h.b16 %v1616
        %v1680 = vunpack.c.l.b16 %v1617
        %v1681 = vunpack.c.h.b16 %v1617
        %v1682 = vunpack.c.l.b16 %v1618
        %v1683 = vunpack.c.h.b16 %v1618
        %v1684 = vunpack.c.l.b16 %v1619
        %v1685 = vunpack.c.h.b16 %v1619
        %v1686 = vunpack.c.l.b16 %v1620
        %v1687 = vunpack.c.h.b16 %v1620
        %v1688 = vunpack.c.l.b16 %v1621
        %v1689 = vunpack.c.h.b16 %v1621
        %v1690 = vunpack.c.l.b16 %v1622
        %v1691 = vunpack.c.h.b16 %v1622
        %v1692 = vunpack.c.l.b16 %v1623
        %v1693 = vunpack.c.h.b16 %v1623
        %v1694 = vunpack.c.l.b16 %v1624
        %v1695 = vunpack.c.h.b16 %v1624
        %v1696 = vunpack.c.l.b16 %v1625
        %v1697 = vunpack.c.h.b16 %v1625
        %v1698 = vpack.c.b16 %v1652, %v1650
        %v1699 = vpack.c.b16 %v1653, %v1651
        %v1700 = vpack.c.b16 %v1656, %v1654
        %v1701 = vpack.c.b16 %v1657, %v1655
        %v1702 = vpack.c.b16 %v1660, %v1658
        %v1703 = vpack.c.b16 %v1661, %v1659
        %v1704 = vpack.c.b16 %v1664, %v1662
        %v1705 = vpack.c.b16 %v1665, %v1663
        %v1706 = vpack.c.b16 %v1668, %v1666
        %v1707 = vpack.c.b16 %v1669, %v1667
        %v1708 = vpack.c.b16 %v1672, %v1670
        %v1709 = vpack.c.b16 %v1673, %v1671
        %v1710 = vpack.c.b16 %v1676, %v1674
        %v1711 = vpack.c.b16 %v1677, %v1675
        %v1712 = vpack.c.b16 %v1680, %v1678
        %v1713 = vpack.c.b16 %v1681, %v1679
        %v1714 = vpack.c.b16 %v1684, %v1682
        %v1715 = vpack.c.b16 %v1685, %v1683
        %v1716 = vpack.c.b16 %v1688, %v1686
        %v1717 = vpack.c.b16 %v1689, %v1687
        %v1718 = vpack.c.b16 %v1692, %v1690
        %v1719 = vpack.c.b16 %v1693, %v1691
        %v1720 = vpack.c.b16 %v1696, %v1694
        %v1721 = vpack.c.b16 %v1697, %v1695
        %v1747 = vsel %vm446, %v1600, 0
        %1749 = vmatpush.bf16.msra.mxu0 %v1712
        %1750 = vmatpush.bf16.msra.mxu0 %v1710
        %1751 = vmatpush.bf16.msra.mxu0 %v1708
        %1752 = vmatpush.bf16.msra.mxu0 %v1706
        %1753 = vmatpush.bf16.msra.mxu0 %v1704
        %1754 = vmatpush.bf16.msra.mxu0 %v1702
        %1755 = vmatpush.bf16.msra.mxu0 %v1700
        %1756 = vmatpush.bf16.msra.mxu0 %v1698
        %1757 = vmatmul.bf16.gmra.mxu0 %v1599
        %v1758 = vpop.f32.mrf.mxu0
        %v1759 = vadd.f32 0.0, %v1758
        %v1760 = vpop.f32.mrf.mxu0
        %1761 = vdwg.mxu0
        %1762 = vmatpush.bf16.msra.mxu0 0
        %1763 = vmatpush.bf16.msra.mxu0 0
        %1764 = vmatpush.bf16.msra.mxu0 0
        %1765 = vmatpush.bf16.msra.mxu0 0
        %1766 = vmatpush.bf16.msra.mxu0 %v1720
        %1767 = vmatpush.bf16.msra.mxu0 %v1718
        %1768 = vmatpush.bf16.msra.mxu0 %v1716
        %1769 = vmatpush.bf16.msra.mxu0 %v1714
        %1770 = vmatmul.bf16.gmra.mxu0 %v1747
        %v1771 = vpop.f32.mrf.mxu0
        %v1772 = vadd.f32 %v1759, %v1771
        %v1773 = vpop.f32.mrf.mxu0
        %1774 = vdwg.mxu0
        %1775 = vmatpush.bf16.msra.mxu0 %v1713
        %1776 = vmatpush.bf16.msra.mxu0 %v1711
        %1777 = vmatpush.bf16.msra.mxu0 %v1709
        %1778 = vmatpush.bf16.msra.mxu0 %v1707
        %1779 = vmatpush.bf16.msra.mxu0 %v1705
        %1780 = vmatpush.bf16.msra.mxu0 %v1703
        %1781 = vmatpush.bf16.msra.mxu0 %v1701
        %1782 = vmatpush.bf16.msra.mxu0 %v1699
        %1783 = vmatmul.bf16.gmra.mxu0 %v1599
        %v1784 = vpop.f32.mrf.mxu0
        %v1785 = vadd.f32 0.0, %v1784
        %v1786 = vpop.f32.mrf.mxu0
        %1787 = vdwg.mxu0
        %1788 = vmatpush.bf16.msra.mxu0 0
        %1789 = vmatpush.bf16.msra.mxu0 0
        %1790 = vmatpush.bf16.msra.mxu0 0
        %1791 = vmatpush.bf16.msra.mxu0 0
        %1792 = vmatpush.bf16.msra.mxu0 %v1721
        %1793 = vmatpush.bf16.msra.mxu0 %v1719
        %1794 = vmatpush.bf16.msra.mxu0 %v1717
        %1795 = vmatpush.bf16.msra.mxu0 %v1715
        %1796 = vmatmul.bf16.gmra.mxu0 %v1747
        %v1797 = vpop.f32.mrf.mxu0
        %v1798 = vadd.f32 %v1785, %v1797
        %v1799 = vpop.f32.mrf.mxu0
        %1800 = vdwg.mxu0
        %v1801 = vadd.f32 %v1568, %v1772
        %v1802 = vadd.f32 %v1594, %v1798
        %v1803 = vld [vmem:[#allocation4 + $0x10] sm:$0x1e]
        %v1804 = vld [vmem:[#allocation4 + $0x18] sm:$0x1e]
        %v1805 = vpack.c.bf16 %v1803, %v1803
        %v1806 = vpack.c.bf16 %v1804, %v1804
        %s1807 = scalar_lea.vmem [#allocation14], 384
        %v1808 = vld [vmem:[%s1807] sm:$0xff]
        %v1809 = vld [vmem:[%s1807 + $0x8] sm:$0xff]
        %v1810 = vld [vmem:[%s1807 + $0x10] sm:$0xff]
        %v1811 = vld [vmem:[%s1807 + $0x18] sm:$0xff]
        %v1812 = vld [vmem:[%s1807 + $0x20] sm:$0xff]
        %v1813 = vld [vmem:[%s1807 + $0x28] sm:$0xff]
        %v1814 = vld [vmem:[%s1807 + $0x30] sm:$0xff]
        %v1815 = vld [vmem:[%s1807 + $0x38] sm:$0xff]
        %v1816 = vld [vmem:[%s1807 + $0x40] sm:$0xff]
        %v1817 = vld [vmem:[%s1807 + $0x48] sm:$0xff]
        %v1818 = vld [vmem:[%s1807 + $0x50] sm:$0xff]
        %v1819 = vld [vmem:[%s1807 + $0x58] sm:$0xff]
        %v1820 = vld [vmem:[%s1807 + $0x60] sm:$0xff]
        %v1821 = vld [vmem:[%s1807 + $0x68] sm:$0xff]
        %v1822 = vld [vmem:[%s1807 + $0x70] sm:$0xff]
        %v1823 = vld [vmem:[%s1807 + $0x78] sm:$0xff]
        %v1824 = vld [vmem:[%s1807 + $0x80] sm:$0xff]
        %v1825 = vld [vmem:[%s1807 + $0x88] sm:$0xff]
        %v1826 = vld [vmem:[%s1807 + $0x90] sm:$0xff]
        %v1827 = vld [vmem:[%s1807 + $0x98] sm:$0xff]
        %v1828 = vld [vmem:[%s1807 + $0xa0] sm:$0xff]
        %v1829 = vld [vmem:[%s1807 + $0xa8] sm:$0xff]
        %v1830 = vld [vmem:[%s1807 + $0xb0] sm:$0xff]
        %v1831 = vld [vmem:[%s1807 + $0xb8] sm:$0xff]
        %v1833 = vshrl.u32 %v1805, 16
        %v1835 = vshll.u32 %v1805, 16
        %v1837 = vrot.slane %v1835, 1
        %v1838 = vor.u32 %v1833, %v1837
        %v1840 = vshrl.u32 %v1806, 16
        %v1842 = vshll.u32 %v1806, 16
        %v1844 = vrot.slane %v1842, 1
        %v1845 = vor.u32 %v1840, %v1844
        %v1871 = vunpack.c.l.b16 %v1808
        %v1872 = vunpack.c.h.b16 %v1808
        %v1873 = vunpack.c.l.b16 %v1809
        %v1874 = vunpack.c.h.b16 %v1809
        %v1875 = vunpack.c.l.b16 %v1810
        %v1876 = vunpack.c.h.b16 %v1810
        %v1877 = vunpack.c.l.b16 %v1811
        %v1878 = vunpack.c.h.b16 %v1811
        %v1879 = vunpack.c.l.b16 %v1812
        %v1880 = vunpack.c.h.b16 %v1812
        %v1881 = vunpack.c.l.b16 %v1813
        %v1882 = vunpack.c.h.b16 %v1813
        %v1883 = vunpack.c.l.b16 %v1814
        %v1884 = vunpack.c.h.b16 %v1814
        %v1885 = vunpack.c.l.b16 %v1815
        %v1886 = vunpack.c.h.b16 %v1815
        %v1887 = vunpack.c.l.b16 %v1816
        %v1888 = vunpack.c.h.b16 %v1816
        %v1889 = vunpack.c.l.b16 %v1817
        %v1890 = vunpack.c.h.b16 %v1817
        %v1891 = vunpack.c.l.b16 %v1818
        %v1892 = vunpack.c.h.b16 %v1818
        %v1893 = vunpack.c.l.b16 %v1819
        %v1894 = vunpack.c.h.b16 %v1819
        %v1895 = vunpack.c.l.b16 %v1820
        %v1896 = vunpack.c.h.b16 %v1820
        %v1897 = vunpack.c.l.b16 %v1821
        %v1898 = vunpack.c.h.b16 %v1821
        %v1899 = vunpack.c.l.b16 %v1822
        %v1900 = vunpack.c.h.b16 %v1822
        %v1901 = vunpack.c.l.b16 %v1823
        %v1902 = vunpack.c.h.b16 %v1823
        %v1903 = vunpack.c.l.b16 %v1824
        %v1904 = vunpack.c.h.b16 %v1824
        %v1905 = vunpack.c.l.b16 %v1825
        %v1906 = vunpack.c.h.b16 %v1825
        %v1907 = vunpack.c.l.b16 %v1826
        %v1908 = vunpack.c.h.b16 %v1826
        %v1909 = vunpack.c.l.b16 %v1827
        %v1910 = vunpack.c.h.b16 %v1827
        %v1911 = vunpack.c.l.b16 %v1828
        %v1912 = vunpack.c.h.b16 %v1828
        %v1913 = vunpack.c.l.b16 %v1829
        %v1914 = vunpack.c.h.b16 %v1829
        %v1915 = vunpack.c.l.b16 %v1830
        %v1916 = vunpack.c.h.b16 %v1830
        %v1917 = vunpack.c.l.b16 %v1831
        %v1918 = vunpack.c.h.b16 %v1831
        %v1919 = vpack.c.b16 %v1873, %v1871
        %v1920 = vpack.c.b16 %v1874, %v1872
        %v1921 = vpack.c.b16 %v1877, %v1875
        %v1922 = vpack.c.b16 %v1878, %v1876
        %v1923 = vpack.c.b16 %v1881, %v1879
        %v1924 = vpack.c.b16 %v1882, %v1880
        %v1925 = vpack.c.b16 %v1885, %v1883
        %v1926 = vpack.c.b16 %v1886, %v1884
        %v1927 = vpack.c.b16 %v1889, %v1887
        %v1928 = vpack.c.b16 %v1890, %v1888
        %v1929 = vpack.c.b16 %v1893, %v1891
        %v1930 = vpack.c.b16 %v1894, %v1892
        %v1931 = vpack.c.b16 %v1897, %v1895
        %v1932 = vpack.c.b16 %v1898, %v1896
        %v1933 = vpack.c.b16 %v1901, %v1899
        %v1934 = vpack.c.b16 %v1902, %v1900
        %v1935 = vpack.c.b16 %v1905, %v1903
        %v1936 = vpack.c.b16 %v1906, %v1904
        %v1937 = vpack.c.b16 %v1909, %v1907
        %v1938 = vpack.c.b16 %v1910, %v1908
        %v1939 = vpack.c.b16 %v1913, %v1911
        %v1940 = vpack.c.b16 %v1914, %v1912
        %v1941 = vpack.c.b16 %v1917, %v1915
        %v1942 = vpack.c.b16 %v1918, %v1916
        %v1968 = vsel %vm446, %v1845, 0
        %1970 = vmatpush.bf16.msra.mxu0 %v1933
        %1971 = vmatpush.bf16.msra.mxu0 %v1931
        %1972 = vmatpush.bf16.msra.mxu0 %v1929
        %1973 = vmatpush.bf16.msra.mxu0 %v1927
        %1974 = vmatpush.bf16.msra.mxu0 %v1925
        %1975 = vmatpush.bf16.msra.mxu0 %v1923
        %1976 = vmatpush.bf16.msra.mxu0 %v1921
        %1977 = vmatpush.bf16.msra.mxu0 %v1919
        %1978 = vmatmul.bf16.gmra.mxu0 %v1838
        %v1979 = vpop.f32.mrf.mxu0
        %v1980 = vadd.f32 0.0, %v1979
        %v1981 = vpop.f32.mrf.mxu0
        %1982 = vdwg.mxu0
        %1983 = vmatpush.bf16.msra.mxu0 0
        %1984 = vmatpush.bf16.msra.mxu0 0
        %1985 = vmatpush.bf16.msra.mxu0 0
        %1986 = vmatpush.bf16.msra.mxu0 0
        %1987 = vmatpush.bf16.msra.mxu0 %v1941
        %1988 = vmatpush.bf16.msra.mxu0 %v1939
        %1989 = vmatpush.bf16.msra.mxu0 %v1937
        %1990 = vmatpush.bf16.msra.mxu0 %v1935
        %1991 = vmatmul.bf16.gmra.mxu0 %v1968
        %v1992 = vpop.f32.mrf.mxu0
        %v1993 = vadd.f32 %v1980, %v1992
        %v1994 = vpop.f32.mrf.mxu0
        %1995 = vdwg.mxu0
        %1996 = vmatpush.bf16.msra.mxu0 %v1934
        %1997 = vmatpush.bf16.msra.mxu0 %v1932
        %1998 = vmatpush.bf16.msra.mxu0 %v1930
        %1999 = vmatpush.bf16.msra.mxu0 %v1928
        %2000 = vmatpush.bf16.msra.mxu0 %v1926
        %2001 = vmatpush.bf16.msra.mxu0 %v1924
        %2002 = vmatpush.bf16.msra.mxu0 %v1922
        %2003 = vmatpush.bf16.msra.mxu0 %v1920
        %2004 = vmatmul.bf16.gmra.mxu0 %v1838
        %v2005 = vpop.f32.mrf.mxu0
        %v2006 = vadd.f32 0.0, %v2005
        %v2007 = vpop.f32.mrf.mxu0
        %2008 = vdwg.mxu0
        %2009 = vmatpush.bf16.msra.mxu0 0
        %2010 = vmatpush.bf16.msra.mxu0 0
        %2011 = vmatpush.bf16.msra.mxu0 0
        %2012 = vmatpush.bf16.msra.mxu0 0
        %2013 = vmatpush.bf16.msra.mxu0 %v1942
        %2014 = vmatpush.bf16.msra.mxu0 %v1940
        %2015 = vmatpush.bf16.msra.mxu0 %v1938
        %2016 = vmatpush.bf16.msra.mxu0 %v1936
        %2017 = vmatmul.bf16.gmra.mxu0 %v1968
        %v2018 = vpop.f32.mrf.mxu0
        %v2019 = vadd.f32 %v2006, %v2018
        %v2020 = vpop.f32.mrf.mxu0
        %2021 = vdwg.mxu0
        %v2022 = vadd.f32 %v1801, %v1993
        %v2023 = vadd.f32 %v1802, %v2019
        %v2024 = vmax.f32 %v2022, 0.0
        %v2025 = vmax.f32 %v2023, 0.0
        %v2026 = vmax.f32 %v2024, %v2025
        %2027 = vst [vmem:[#allocation5] sm:$0xf] %v2026
        %v2028 = vld [vmem:[%s8] sm:$0x1]
        %v2029 = vld [vmem:[#allocation5] sm:$0x1]
        %v2030 = vld [vmem:[#allocation5 + $0x1] sm:$0x1]
        %v2031 = vmax.f32 %v2029, %v2030
        %v2032 = vpack.c.bf16 %v2031, %v2031
        %v2033 = vld [vmem:[#allocation15] sm:$0xf]
        %v2034 = vld [vmem:[#allocation15 + $0x4] sm:$0xf]
        %v2035 = vld [vmem:[#allocation15 + $0x8] sm:$0xf]
        %v2036 = vld [vmem:[#allocation15 + $0xc] sm:$0xf]
        %v2037 = vld [vmem:[#allocation15 + $0x10] sm:$0xf]
        %v2038 = vld [vmem:[#allocation15 + $0x14] sm:$0xf]
        %v2039 = vld [vmem:[#allocation15 + $0x18] sm:$0xf]
        %v2040 = vld [vmem:[#allocation15 + $0x1c] sm:$0xf]
        %v2041 = vld [vmem:[#allocation15 + $0x20] sm:$0xf]
        %v2042 = vld [vmem:[#allocation15 + $0x24] sm:$0xf]
        %v2043 = vld [vmem:[#allocation15 + $0x28] sm:$0xf]
        %v2044 = vld [vmem:[#allocation15 + $0x2c] sm:$0xf]
        %v2045 = vld [vmem:[#allocation15 + $0x30] sm:$0xf]
        %v2046 = vld [vmem:[#allocation15 + $0x34] sm:$0xf]
        %v2047 = vld [vmem:[#allocation15 + $0x38] sm:$0xf]
        %v2048 = vld [vmem:[#allocation15 + $0x3c] sm:$0xf]
        %v2065 = vunpack.c.l.b16 %v2033
        %v2066 = vunpack.c.l.b16 %v2034
        %v2067 = vunpack.c.l.b16 %v2035
        %v2068 = vunpack.c.l.b16 %v2036
        %v2069 = vunpack.c.l.b16 %v2037
        %v2070 = vunpack.c.l.b16 %v2038
        %v2071 = vunpack.c.l.b16 %v2039
        %v2072 = vunpack.c.l.b16 %v2040
        %v2073 = vunpack.c.l.b16 %v2041
        %v2074 = vunpack.c.l.b16 %v2042
        %v2075 = vunpack.c.l.b16 %v2043
        %v2076 = vunpack.c.l.b16 %v2044
        %v2077 = vunpack.c.l.b16 %v2045
        %v2078 = vunpack.c.l.b16 %v2046
        %v2079 = vunpack.c.l.b16 %v2047
        %v2080 = vunpack.c.l.b16 %v2048
        %v2081 = vpack.c.b16 %v2066, %v2065
        %v2082 = vpack.c.b16 %v2068, %v2067
        %v2083 = vpack.c.b16 %v2070, %v2069
        %v2084 = vpack.c.b16 %v2072, %v2071
        %v2085 = vpack.c.b16 %v2074, %v2073
        %v2086 = vpack.c.b16 %v2076, %v2075
        %v2087 = vpack.c.b16 %v2078, %v2077
        %v2088 = vpack.c.b16 %v2080, %v2079
        %2097 = vmatpush.bf16.msra.mxu0 %v2088
        %2098 = vmatpush.bf16.msra.mxu0 %v2087
        %2099 = vmatpush.bf16.msra.mxu0 %v2086
        %2100 = vmatpush.bf16.msra.mxu0 %v2085
        %2101 = vmatpush.bf16.msra.mxu0 %v2084
        %2102 = vmatpush.bf16.msra.mxu0 %v2083
        %2103 = vmatpush.bf16.msra.mxu0 %v2082
        %2104 = vmatpush.bf16.msra.mxu0 %v2081
        %2105 = vmatmul.bf16.gmra.mxu0 %v2032
        %v2106 = vpop.f32.mrf.mxu0
        %v2107 = vadd.f32 0.0, %v2106
        %v2108 = vpop.f32.mrf.mxu0
        %2109 = vdwg.mxu0
        %v2110 = vadd.f32 %v2028, %v2107
        %v2111 = vld [vmem:[#allocation5 + $0x2] sm:$0x1]
        %v2112 = vld [vmem:[#allocation5 + $0x3] sm:$0x1]
        %v2113 = vmax.f32 %v2111, %v2112
        %v2114 = vpack.c.bf16 %v2113, %v2113
        %s2115 = scalar_lea.vmem [#allocation15], 64
        %v2116 = vld [vmem:[%s2115] sm:$0xf]
        %v2117 = vld [vmem:[%s2115 + $0x4] sm:$0xf]
        %v2118 = vld [vmem:[%s2115 + $0x8] sm:$0xf]
        %v2119 = vld [vmem:[%s2115 + $0xc] sm:$0xf]
        %v2120 = vld [vmem:[%s2115 + $0x10] sm:$0xf]
        %v2121 = vld [vmem:[%s2115 + $0x14] sm:$0xf]
        %v2122 = vld [vmem:[%s2115 + $0x18] sm:$0xf]
        %v2123 = vld [vmem:[%s2115 + $0x1c] sm:$0xf]
        %v2124 = vld [vmem:[%s2115 + $0x20] sm:$0xf]
        %v2125 = vld [vmem:[%s2115 + $0x24] sm:$0xf]
        %v2126 = vld [vmem:[%s2115 + $0x28] sm:$0xf]
        %v2127 = vld [vmem:[%s2115 + $0x2c] sm:$0xf]
        %v2128 = vld [vmem:[%s2115 + $0x30] sm:$0xf]
        %v2129 = vld [vmem:[%s2115 + $0x34] sm:$0xf]
        %v2130 = vld [vmem:[%s2115 + $0x38] sm:$0xf]
        %v2131 = vld [vmem:[%s2115 + $0x3c] sm:$0xf]
        %v2148 = vunpack.c.l.b16 %v2116
        %v2149 = vunpack.c.l.b16 %v2117
        %v2150 = vunpack.c.l.b16 %v2118
        %v2151 = vunpack.c.l.b16 %v2119
        %v2152 = vunpack.c.l.b16 %v2120
        %v2153 = vunpack.c.l.b16 %v2121
        %v2154 = vunpack.c.l.b16 %v2122
        %v2155 = vunpack.c.l.b16 %v2123
        %v2156 = vunpack.c.l.b16 %v2124
        %v2157 = vunpack.c.l.b16 %v2125
        %v2158 = vunpack.c.l.b16 %v2126
        %v2159 = vunpack.c.l.b16 %v2127
        %v2160 = vunpack.c.l.b16 %v2128
        %v2161 = vunpack.c.l.b16 %v2129
        %v2162 = vunpack.c.l.b16 %v2130
        %v2163 = vunpack.c.l.b16 %v2131
        %v2164 = vpack.c.b16 %v2149, %v2148
        %v2165 = vpack.c.b16 %v2151, %v2150
        %v2166 = vpack.c.b16 %v2153, %v2152
        %v2167 = vpack.c.b16 %v2155, %v2154
        %v2168 = vpack.c.b16 %v2157, %v2156
        %v2169 = vpack.c.b16 %v2159, %v2158
        %v2170 = vpack.c.b16 %v2161, %v2160
        %v2171 = vpack.c.b16 %v2163, %v2162
        %2180 = vmatpush.bf16.msra.mxu0 %v2171
        %2181 = vmatpush.bf16.msra.mxu0 %v2170
        %2182 = vmatpush.bf16.msra.mxu0 %v2169
        %2183 = vmatpush.bf16.msra.mxu0 %v2168
        %2184 = vmatpush.bf16.msra.mxu0 %v2167
        %2185 = vmatpush.bf16.msra.mxu0 %v2166
        %2186 = vmatpush.bf16.msra.mxu0 %v2165
        %2187 = vmatpush.bf16.msra.mxu0 %v2164
        %2188 = vmatmul.bf16.gmra.mxu0 %v2114
        %v2189 = vpop.f32.mrf.mxu0
        %v2190 = vadd.f32 0.0, %v2189
        %v2191 = vpop.f32.mrf.mxu0
        %2192 = vdwg.mxu0
        %v2193 = vadd.f32 %v2110, %v2190
        %2194 = vst [vmem:[%s433 + $0x1] sm:$0x7f] 0.0
        %2195 = vst [vmem:[%s433] sm:$0x1] %v2193
        %s2196 = sand.u32 %s231, 1
        %s2197 = scalar_lea.sflag [#allocation8], %s2196
        %s2198 = sand.u32 %s231, 1
        %s2199 = smul.addr %s2198, 8
        %s2200 = scalar_lea.vmem [#allocation17], %s2199
        // Predicated region
        $region81: #{tpu_custom_call.1} parent=55 // pred_check
          %p2201 = pneg %p241
        $region82: #{tpu_custom_call.1} parent=55 // pred_check_branch
          %2203 = sbr.rel (%p2201) target = $region84
        $region83: #{tpu_custom_call.1} parent=55 // pred_region
          %2205 = vsyncadd %s2197, 0
          %s2206 = smul.addr %s29, 8
          %s2207 = scalar_lea.hbm %s9, %s2206
          %s2209 = sshll.u32 %s2200, 4
          %s2210 = int_to_ptr.vmem [resolvable:$true] %s2209
          %s2211 = sshll.u32 %s2207, 4
          %s2212 = int_to_ptr.hbm [resolvable:$true] %s2211
          %2214 = dma.vmem_to_hbm [thread:$0]  %s2210, 128, %s2212, %s2197
        $region84: #{tpu_custom_call.1} parent=55 // pred_fallthru
          _
      $region56: #{tpu_custom_call.1} parent=5 // pred_fallthru
        _
      %p2215 = scmp.le.s32.totalorder 2, %s24
      // Predicated region
      $region85: #{tpu_custom_call.1} parent=5 // pred_check
        %p2216 = pneg %p2215
      $region86: #{tpu_custom_call.1} parent=5 // pred_check_branch
        %2218 = sbr.rel (%p2216) target = $region88
      $region87: #{tpu_custom_call.1} parent=5 // pred_region
        %s2219 = ssub.s32 %s24, 2
        // Predicated region
        $region89: #{tpu_custom_call.1} parent=87 // pred_check
          %p2220 = pneg %p247
        $region90: #{tpu_custom_call.1} parent=87 // pred_check_branch
          %2222 = sbr.rel (%p2220) target = $region92
        $region91: #{tpu_custom_call.1} parent=87 // pred_region
          %s2223 = sand.u32 %s232, 1
          %s2224 = scalar_lea.sflag [#allocation8], %s2223
          %s2225 = sand.u32 %s232, 1
          %s2226 = smul.addr %s2225, 8
          %s2227 = scalar_lea.vmem [#allocation17], %s2226
          %2229 = dma.done %s2224, 128
        $region92: #{tpu_custom_call.1} parent=87 // pred_fallthru
          _
      $region88: #{tpu_custom_call.1} parent=5 // pred_fallthru
        _
    $region6: #{tpu_custom_call.1} parent=1 // loop_footer
      %s28 = sadd.s32 1, %s24
    $region7: #{tpu_custom_call.1} parent=1 // loop_footer_branch
      %23 = sbr.rel target = $region3
    $region8: #{tpu_custom_call.1} parent=1 // loop_exit
      _
    %2230 = vsyncpa [#allocation7], 1
    %s2231 = scalar_lea.sflag [#allocation7], 1
    %2232 = vsyncpa %s2231, 1
    %2233 = vsyncpa [#allocation10], 1
    %2234 = vsyncpa [#allocation13], 1
    %2235 = vsyncpa [#allocation16], 1
    %2236 = vsyncpa [#allocation8], 1
    %s2237 = scalar_lea.sflag [#allocation8], 1
    %2238 = vsyncpa %s2237, 1

</llo_original>
